<compile_context>
chip_gen: v6e
topology: v6e:2x2x1
jax: 0.10.0
libtpu: 0.0.40
codegen_flags: <defaults>
</compile_context>

<pallas_src>
import jax
import jax.numpy as jnp
from jax.experimental import pallas as pl
from jax.experimental.pallas import tpu as pltpu


SLOT_C = 128  # lane width of each packed weight slot (keeps the final store lane-dense)


def _pad8(n):
    return ((n + 7) // 8) * 8


# ----------------------------- Pallas kernel --------------------------------
def _make_kernel(dims):
    R1, R2, R3, R4, R5, R6 = dims  # padded (multiple-of-8) hidden widths

    def kernel(xc_ref, xr_ref, a_ref, wpack_ref, out_ref):
        A = a_ref[...]            # (M, M) block-diagonal adjacency for Bt graphs
        xc = xc_ref[...]          # (M, 1) node features, column layout
        xr = xr_ref[...]          # (1, M) same values, row layout (no in-kernel transpose)

        def slot(i, rows, cols):
            # ref-level static slice: loads only the needed sublanes/lanes of the slot
            return wpack_ref[i, 0:rows, 0:cols]

        relu = lambda v: jnp.maximum(v, 0.0)

        # --- GraphConv 1 (din=1): aggregation on VPU (mul) + XLU (lane reduce),
        #     keeps the MXU off the head of the serial dependence chain. ---
        agg = jnp.sum(A * xr, axis=-1, keepdims=True)                       # (M, 1)
        h = relu(xc * slot(0, 1, R1) + agg * slot(1, 1, R1) + slot(2, 1, R1))  # (M, R1)

        # --- GraphConv 2..4: fused  [h | A@h] @ [[W_root]; [W_neigh]] + b ---
        def gconv(h, w_idx, b_idx, din, dout):
            agg = jnp.dot(A, h, preferred_element_type=jnp.float32)         # (M, din)
            cat = jnp.concatenate([h, agg], axis=-1)                         # (M, 2*din)
            return (jnp.dot(cat, slot(w_idx, 2 * din, dout),
                            preferred_element_type=jnp.float32)
                    + slot(b_idx, 1, dout))

        h = relu(gconv(h, 3, 4, R1, R2))
        h = relu(gconv(h, 5, 6, R2, R3))
        h = relu(gconv(h, 7, 8, R3, R4))

        def linear(h, w_idx, b_idx, din, dout):
            return (jnp.dot(h, slot(w_idx, din, dout),
                            preferred_element_type=jnp.float32)
                    + slot(b_idx, 1, dout))

        h = relu(linear(h, 9, 10, R4, R5))
        h = relu(linear(h, 11, 12, R5, R6))
        # final Linear uses the full 128-wide zero-padded slot -> lane-dense store
        h = linear(h, 13, 14, R6, SLOT_C)                                    # (M, 128)

        out_ref[...] = h.astype(out_ref.dtype)

    return kernel


# --------------------------- weight packing ----------------------------------
def pack_params(params, raw_feature_size):
    """Pack all 17 tensors into one zero-padded (n_slots, slot_r, 128) slab.

    Hidden widths are zero-padded to multiples of 8; padded weight rows/cols and
    bias lanes are zero, and ReLU(0)=0, so the real output columns are exact.
    Call this ONCE per parameter set (hoisted out of the per-call path).
    """
    r1 = params["gcn1"][0].shape[1]
    r2 = params["gcn2"][0].shape[1]
    r3 = params["gcn3"][0].shape[1]
    r4 = params["gcn4"][0].shape[1]
    r5 = params["fc1"][0].shape[1]
    r6 = params["fc2"][0].shape[1]
    assert params["fc3"][0].shape[1] == raw_feature_size
    assert raw_feature_size <= SLOT_C and _pad8(r5) <= SLOT_C

    R1, R2, R3, R4, R5, R6 = map(_pad8, (r1, r2, r3, r4, r5, r6))
    slot_r = _pad8(max(1, 2 * R1, 2 * R2, 2 * R3, R4, R5, R6))

    def pad_to(w, rows, cols):
        w = jnp.asarray(w, jnp.float32)
        return jnp.pad(w, ((0, rows - w.shape[0]), (0, cols - w.shape[1])))

    def slot_pad(w):
        return pad_to(w, slot_r, SLOT_C)

    wn1, wr1, b1 = params["gcn1"]
    slots = [slot_pad(wr1), slot_pad(wn1), slot_pad(b1)]            # slots 0,1,2

    for name, din_p, dout_p in (("gcn2", R1, R2),
                                ("gcn3", R2, R3),
                                ("gcn4", R3, R4)):                   # slots 3..8
        wn, wr, b = params[name]
        wcat = jnp.concatenate([pad_to(wr, din_p, dout_p),
                                pad_to(wn, din_p, dout_p)], axis=0)  # [h | A@h] @ [[Wr];[Wn]]
        slots += [slot_pad(wcat), slot_pad(b)]

    for name, din_p, dout_p in (("fc1", R4, R5), ("fc2", R5, R6)):   # slots 9..12
        w, b = params[name]
        slots += [slot_pad(pad_to(w, din_p, dout_p)), slot_pad(b)]

    w, b = params["fc3"]                                             # slots 13,14
    slots += [slot_pad(pad_to(w, R6, SLOT_C)), slot_pad(b)]          # padded to 128 lanes

    wpack = jnp.stack(slots, axis=0)                                 # (15, slot_r, 128)
    return wpack, (R1, R2, R3, R4, R5, R6), slot_r


# ----------------------------- tiling choice ----------------------------------
def _pick_bt(B, N):
    """Graphs per grid step: fill ~256 MXU rows, but keep >=2 grid steps (v7x has
    two TensorCores) whenever that still leaves >=128 rows per step."""
    cap = max(1, 256 // N)
    bt = 1
    for d in range(1, min(B, cap) + 1):
        if B % d == 0:
            bt = d
    if B // bt < 2:
        for d in range(bt - 1, 0, -1):
            if B % d == 0 and B // d >= 2 and d * N >= 128:
                bt = d
                break
    return bt


# ------------------------------- wrappers -------------------------------------
def feature_generation_net2_batched(x, edge_index, wpack, *, dims, slot_r,
                                    raw_feature_size):
    """x: (B, N, 1) f32; edge_index: (B, 2, E) int32 (row 0 = src, row 1 = dst);
    wpack/dims/slot_r from pack_params()."""
    B, N, _ = x.shape
    Bt = _pick_bt(B, N)
    G = B // Bt
    M = Bt * N

    # --- dense adjacency via one-hot einsum (no XLA scatter), A[b, dst, src] += 1 ---
    src = edge_index[:, 0, :]
    dst = edge_index[:, 1, :]
    src_oh = jax.nn.one_hot(src, N, dtype=jnp.float32)               # (B, E, N)
    dst_oh = jax.nn.one_hot(dst, N, dtype=jnp.float32)
    A = jnp.einsum('bei,bej->bij', dst_oh, src_oh)                   # (B, N, N), dup edges add

    # --- block-diagonal adjacency per group of Bt graphs: exact (off-blocks = 0) ---
    A_g = A.reshape(G, Bt, N, N)
    eye = jnp.eye(Bt, dtype=jnp.float32)
    A_bd = (A_g[:, :, :, None, :] * eye[None, :, None, :, None]).reshape(G, M, M)

    x_col = x.astype(jnp.float32).reshape(G, M, 1)
    x_row = x.astype(jnp.float32).reshape(G, 1, M)

    n_slots = wpack.shape[0]
    kernel = _make_kernel(dims)

    out_padded = pl.pallas_call(
        kernel,
        out_shape=jax.ShapeDtypeStruct((G, M, SLOT_C), jnp.float32),
        grid=(G,),
        in_specs=[
            pl.BlockSpec((None, M, 1), lambda g: (g, 0, 0)),                 # x (column)
            pl.BlockSpec((None, 1, M), lambda g: (g, 0, 0)),                 # x (row)
            pl.BlockSpec((None, M, M), lambda g: (g, 0, 0)),                 # block-diag A
            pl.BlockSpec((n_slots, slot_r, SLOT_C), lambda g: (0, 0, 0)),    # packed weights
        ],
        out_specs=pl.BlockSpec((None, M, SLOT_C), lambda g: (g, 0, 0)),
        compiler_params=pltpu.CompilerParams(
            dimension_semantics=("parallel",)),   # shard graph-groups across TCs (v7x)
    )(x_col, x_row, A_bd, wpack)

    return out_padded.reshape(B, N, SLOT_C)[:, :, :raw_feature_size]


def feature_generation_net2(x, edge_index, wpack, *, dims, slot_r, raw_feature_size):
    """Single-graph forward, matching the PyTorch module: x (N, 1), edge_index (2, E)."""
    out = feature_generation_net2_batched(
        x[None], edge_index[None], wpack,
        dims=dims, slot_r=slot_r, raw_feature_size=raw_feature_size)
    return out[0]


# ------------------------- deterministic param init --------------------------
def init_params(key, raw_feature_size,
                gcn_hidden_layer_sizes=(4, 7, 10, 16),
                nn_hidden_layer_sizes=(32, 16)):
    r1, r2, r3, r4 = gcn_hidden_layer_sizes
    r5, r6 = nn_hidden_layer_sizes

    def nxt():
        nonlocal key
        key, sub = jax.random.split(key)
        return sub

    def lin(din, dout):
        w = jax.random.normal(nxt(), (din, dout), jnp.float32) * 0.2
        b = jax.random.normal(nxt(), (1, dout), jnp.float32) * 0.1
        return w, b

    def gcn(din, dout):
        wn, b = lin(din, dout)                                          # neighbor weight + bias
        wr = jax.random.normal(nxt(), (din, dout), jnp.float32) * 0.2   # root weight (no bias)
        return wn, wr, b

    return {
        "gcn1": gcn(1, r1),
        "gcn2": gcn(r1, r2),
        "gcn3": gcn(r2, r3),
        "gcn4": gcn(r3, r4),
        "fc1": lin(r4, r5),
        "fc2": lin(r5, r6),
        "fc3": lin(r6, raw_feature_size),
    }


# ------------------------------ pure-JAX ref ----------------------------------
def reference_batched(x, edge_index, params):
    def single(xg, eg):
        N = xg.shape[0]
        src, dst = eg[0], eg[1]
        A = jnp.zeros((N, N), jnp.float32).at[dst, src].add(1.0)

        def gconv(h, p):
            wn, wr, b = p
            return (A @ h) @ wn + h @ wr + b

        h = jax.nn.relu(gconv(xg, params["gcn1"]))
        h = jax.nn.relu(gconv(h, params["gcn2"]))
        h = jax.nn.relu(gconv(h, params["gcn3"]))
        h = jax.nn.relu(gconv(h, params["gcn4"]))
        h = jax.nn.relu(h @ params["fc1"][0] + params["fc1"][1])
        h = jax.nn.relu(h @ params["fc2"][0] + params["fc2"][1])
        return h @ params["fc3"][0] + params["fc3"][1]

    return jax.vmap(single)(x, edge_index)


if __name__ == "__main__":
    key = jax.random.PRNGKey(0)

    B = 16                    # graphs per call (batched 8 per grid step -> grid=(2,))
    N = 16                    # nodes per graph
    E = 32                    # directed edges per graph
    RAW_FEATURE_SIZE = 24

    k_feat, k_src, k_dst, k_param = jax.random.split(key, 4)
    x = jax.random.normal(k_feat, (B, N, 1), jnp.float32)
    edge_index = jnp.stack([
        jax.random.randint(k_src, (B, E), 0, N, jnp.int32),
        jax.random.randint(k_dst, (B, E), 0, N, jnp.int32),
    ], axis=1)                                              # (B, 2, E)

    params = init_params(k_param, RAW_FEATURE_SIZE)

    # Pack weights once (hoisted out of the per-call path).
    wpack, dims, slot_r = pack_params(params, RAW_FEATURE_SIZE)

    fwd = jax.jit(feature_generation_net2_batched,
                  static_argnames=("dims", "slot_r", "raw_feature_size"))
    out = fwd(x, edge_index, wpack,
              dims=dims, slot_r=slot_r, raw_feature_size=RAW_FEATURE_SIZE)
    out = jax.block_until_ready(out)

    ref = reference_batched(x, edge_index, params)
    assert out.shape == (B, N, RAW_FEATURE_SIZE)
    assert jnp.allclose(out, ref, atol=1e-4, rtol=1e-4), "mismatch vs JAX reference"

    print("KERNEL_OK")
</pallas_src>

<mosaic_0001>
module attributes {stable_mosaic.version = 11 : i64} {
  func.func @kernel(%arg0: i32, %arg1: memref<1x128x1xf32, #tpu.memory_space<vmem>>, %arg2: memref<1x1x128xf32, #tpu.memory_space<vmem>>, %arg3: memref<1x128x128xf32, #tpu.memory_space<vmem>>, %arg4: memref<15x32x128xf32, #tpu.memory_space<vmem>>, %arg5: memref<1x128x128xf32, #tpu.memory_space<vmem>>) attributes {dimension_semantics = [#tpu.dimension_semantics<parallel>], iteration_bounds = array<i64: 2>, scalar_prefetch = 0 : i64, scratch_operands = 0 : i64, tpu.core_type = #tpu.core_type<tc>, window_params = [{transform_indices = @transform_0, window_bounds = array<i64: 1, 128, 1>}, {transform_indices = @transform_1, window_bounds = array<i64: 1, 1, 128>}, {transform_indices = @transform_2, window_bounds = array<i64: 1, 128, 128>}, {pipeline_mode = #tpu.pipeline_mode<synchronous>, transform_indices = @transform_3, window_bounds = array<i64: 15, 32, 128>}, {transform_indices = @transform_4, window_bounds = array<i64: 1, 128, 128>}]} {
    %c0 = arith.constant 0 : index
    %c0_0 = arith.constant 0 : index
    %c0_1 = arith.constant 0 : index
    %0 = vector.load %arg3[%c0, %c0_0, %c0_1] : memref<1x128x128xf32, #tpu.memory_space<vmem>>, vector<1x128x128xf32>
    %1 = vector.shape_cast %0 : vector<1x128x128xf32> to vector<128x128xf32>
    %c0_2 = arith.constant 0 : index
    %c0_3 = arith.constant 0 : index
    %c0_4 = arith.constant 0 : index
    %2 = vector.load %arg1[%c0_2, %c0_3, %c0_4] : memref<1x128x1xf32, #tpu.memory_space<vmem>>, vector<1x128x1xf32>
    %3 = vector.shape_cast %2 : vector<1x128x1xf32> to vector<128x1xf32>
    %c0_5 = arith.constant 0 : index
    %c0_6 = arith.constant 0 : index
    %c0_7 = arith.constant 0 : index
    %4 = vector.load %arg2[%c0_5, %c0_6, %c0_7] : memref<1x1x128xf32, #tpu.memory_space<vmem>>, vector<1x1x128xf32>
    %5 = vector.shape_cast %4 : vector<1x1x128xf32> to vector<1x128xf32>
    %6 = vector.broadcast %5 : vector<1x128xf32> to vector<128x128xf32>
    %7 = arith.mulf %1, %6 : vector<128x128xf32>
    %cst = arith.constant dense<0.000000e+00> : vector<128xf32>
    %8 = vector.multi_reduction <add>, %7, %cst [1] : vector<128x128xf32> to vector<128xf32>
    %9 = vector.shape_cast %8 : vector<128xf32> to vector<128x1xf32>
    %c0_8 = arith.constant 0 : index
    %c0_9 = arith.constant 0 : index
    %c0_10 = arith.constant 0 : index
    %10 = vector.load %arg4[%c0_8, %c0_9, %c0_10] : memref<15x32x128xf32, #tpu.memory_space<vmem>>, vector<1x1x8xf32>
    %11 = vector.shape_cast %10 : vector<1x1x8xf32> to vector<1x8xf32>
    %12 = vector.broadcast %3 : vector<128x1xf32> to vector<128x8xf32>
    %13 = vector.broadcast %11 : vector<1x8xf32> to vector<128x8xf32>
    %14 = arith.mulf %12, %13 : vector<128x8xf32>
    %c1 = arith.constant 1 : index
    %c0_11 = arith.constant 0 : index
    %c0_12 = arith.constant 0 : index
    %15 = vector.load %arg4[%c1, %c0_11, %c0_12] : memref<15x32x128xf32, #tpu.memory_space<vmem>>, vector<1x1x8xf32>
    %16 = vector.shape_cast %15 : vector<1x1x8xf32> to vector<1x8xf32>
    %17 = vector.broadcast %9 : vector<128x1xf32> to vector<128x8xf32>
    %18 = vector.broadcast %16 : vector<1x8xf32> to vector<128x8xf32>
    %19 = arith.mulf %17, %18 : vector<128x8xf32>
    %20 = arith.addf %14, %19 : vector<128x8xf32>
    %c2 = arith.constant 2 : index
    %c0_13 = arith.constant 0 : index
    %c0_14 = arith.constant 0 : index
    %21 = vector.load %arg4[%c2, %c0_13, %c0_14] : memref<15x32x128xf32, #tpu.memory_space<vmem>>, vector<1x1x8xf32>
    %22 = vector.shape_cast %21 : vector<1x1x8xf32> to vector<1x8xf32>
    %23 = vector.broadcast %22 : vector<1x8xf32> to vector<128x8xf32>
    %24 = arith.addf %20, %23 : vector<128x8xf32>
    %cst_15 = arith.constant 0.000000e+00 : f32
    %25 = vector.broadcast %cst_15 : f32 to vector<128x8xf32>
    %26 = arith.maximumf %24, %25 : vector<128x8xf32>
    %cst_16 = arith.constant dense<0.000000e+00> : vector<128x8xf32>
    %27 = tpu.matmul %1, %26, %cst_16 {dimension_numbers = #tpu.dot_dimension_numbers<[1], [0], [0], [1], [0, 0, 1, 1], [], []>} : vector<128x128xf32>, vector<128x8xf32>, vector<128x8xf32> -> vector<128x8xf32>
    %28 = tpu.concatenate %26, %27 in 1 : vector<128x8xf32>, vector<128x8xf32> -> vector<128x16xf32>
    %c3 = arith.constant 3 : index
    %c0_17 = arith.constant 0 : index
    %c0_18 = arith.constant 0 : index
    %29 = vector.load %arg4[%c3, %c0_17, %c0_18] : memref<15x32x128xf32, #tpu.memory_space<vmem>>, vector<1x16x8xf32>
    %30 = vector.shape_cast %29 : vector<1x16x8xf32> to vector<16x8xf32>
    %cst_19 = arith.constant dense<0.000000e+00> : vector<128x8xf32>
    %31 = tpu.matmul %28, %30, %cst_19 {dimension_numbers = #tpu.dot_dimension_numbers<[1], [0], [0], [1], [0, 0, 1, 1], [], []>} : vector<128x16xf32>, vector<16x8xf32>, vector<128x8xf32> -> vector<128x8xf32>
    %c4 = arith.constant 4 : index
    %c0_20 = arith.constant 0 : index
    %c0_21 = arith.constant 0 : index
    %32 = vector.load %arg4[%c4, %c0_20, %c0_21] : memref<15x32x128xf32, #tpu.memory_space<vmem>>, vector<1x1x8xf32>
    %33 = vector.shape_cast %32 : vector<1x1x8xf32> to vector<1x8xf32>
    %34 = vector.broadcast %33 : vector<1x8xf32> to vector<128x8xf32>
    %35 = arith.addf %31, %34 : vector<128x8xf32>
    %cst_22 = arith.constant 0.000000e+00 : f32
    %36 = vector.broadcast %cst_22 : f32 to vector<128x8xf32>
    %37 = arith.maximumf %35, %36 : vector<128x8xf32>
    %cst_23 = arith.constant dense<0.000000e+00> : vector<128x8xf32>
    %38 = tpu.matmul %1, %37, %cst_23 {dimension_numbers = #tpu.dot_dimension_numbers<[1], [0], [0], [1], [0, 0, 1, 1], [], []>} : vector<128x128xf32>, vector<128x8xf32>, vector<128x8xf32> -> vector<128x8xf32>
    %39 = tpu.concatenate %37, %38 in 1 : vector<128x8xf32>, vector<128x8xf32> -> vector<128x16xf32>
    %c5 = arith.constant 5 : index
    %c0_24 = arith.constant 0 : index
    %c0_25 = arith.constant 0 : index
    %40 = vector.load %arg4[%c5, %c0_24, %c0_25] : memref<15x32x128xf32, #tpu.memory_space<vmem>>, vector<1x16x16xf32>
    %41 = vector.shape_cast %40 : vector<1x16x16xf32> to vector<16x16xf32>
    %cst_26 = arith.constant dense<0.000000e+00> : vector<128x16xf32>
    %42 = tpu.matmul %39, %41, %cst_26 {dimension_numbers = #tpu.dot_dimension_numbers<[1], [0], [0], [1], [0, 0, 1, 1], [], []>} : vector<128x16xf32>, vector<16x16xf32>, vector<128x16xf32> -> vector<128x16xf32>
    %c6 = arith.constant 6 : index
    %c0_27 = arith.constant 0 : index
    %c0_28 = arith.constant 0 : index
    %43 = vector.load %arg4[%c6, %c0_27, %c0_28] : memref<15x32x128xf32, #tpu.memory_space<vmem>>, vector<1x1x16xf32>
    %44 = vector.shape_cast %43 : vector<1x1x16xf32> to vector<1x16xf32>
    %45 = vector.broadcast %44 : vector<1x16xf32> to vector<128x16xf32>
    %46 = arith.addf %42, %45 : vector<128x16xf32>
    %cst_29 = arith.constant 0.000000e+00 : f32
    %47 = vector.broadcast %cst_29 : f32 to vector<128x16xf32>
    %48 = arith.maximumf %46, %47 : vector<128x16xf32>
    %cst_30 = arith.constant dense<0.000000e+00> : vector<128x16xf32>
    %49 = tpu.matmul %1, %48, %cst_30 {dimension_numbers = #tpu.dot_dimension_numbers<[1], [0], [0], [1], [0, 0, 1, 1], [], []>} : vector<128x128xf32>, vector<128x16xf32>, vector<128x16xf32> -> vector<128x16xf32>
    %50 = tpu.concatenate %48, %49 in 1 : vector<128x16xf32>, vector<128x16xf32> -> vector<128x32xf32>
    %c7 = arith.constant 7 : index
    %c0_31 = arith.constant 0 : index
    %c0_32 = arith.constant 0 : index
    %51 = vector.load %arg4[%c7, %c0_31, %c0_32] : memref<15x32x128xf32, #tpu.memory_space<vmem>>, vector<1x32x16xf32>
    %52 = vector.shape_cast %51 : vector<1x32x16xf32> to vector<32x16xf32>
    %cst_33 = arith.constant dense<0.000000e+00> : vector<128x16xf32>
    %53 = tpu.matmul %50, %52, %cst_33 {dimension_numbers = #tpu.dot_dimension_numbers<[1], [0], [0], [1], [0, 0, 1, 1], [], []>} : vector<128x32xf32>, vector<32x16xf32>, vector<128x16xf32> -> vector<128x16xf32>
    %c8 = arith.constant 8 : index
    %c0_34 = arith.constant 0 : index
    %c0_35 = arith.constant 0 : index
    %54 = vector.load %arg4[%c8, %c0_34, %c0_35] : memref<15x32x128xf32, #tpu.memory_space<vmem>>, vector<1x1x16xf32>
    %55 = vector.shape_cast %54 : vector<1x1x16xf32> to vector<1x16xf32>
    %56 = vector.broadcast %55 : vector<1x16xf32> to vector<128x16xf32>
    %57 = arith.addf %53, %56 : vector<128x16xf32>
    %cst_36 = arith.constant 0.000000e+00 : f32
    %58 = vector.broadcast %cst_36 : f32 to vector<128x16xf32>
    %59 = arith.maximumf %57, %58 : vector<128x16xf32>
    %c9 = arith.constant 9 : index
    %c0_37 = arith.constant 0 : index
    %c0_38 = arith.constant 0 : index
    %60 = vector.load %arg4[%c9, %c0_37, %c0_38] : memref<15x32x128xf32, #tpu.memory_space<vmem>>, vector<1x16x32xf32>
    %61 = vector.shape_cast %60 : vector<1x16x32xf32> to vector<16x32xf32>
    %cst_39 = arith.constant dense<0.000000e+00> : vector<128x32xf32>
    %62 = tpu.matmul %59, %61, %cst_39 {dimension_numbers = #tpu.dot_dimension_numbers<[1], [0], [0], [1], [0, 0, 1, 1], [], []>} : vector<128x16xf32>, vector<16x32xf32>, vector<128x32xf32> -> vector<128x32xf32>
    %c10 = arith.constant 10 : index
    %c0_40 = arith.constant 0 : index
    %c0_41 = arith.constant 0 : index
    %63 = vector.load %arg4[%c10, %c0_40, %c0_41] : memref<15x32x128xf32, #tpu.memory_space<vmem>>, vector<1x1x32xf32>
    %64 = vector.shape_cast %63 : vector<1x1x32xf32> to vector<1x32xf32>
    %65 = vector.broadcast %64 : vector<1x32xf32> to vector<128x32xf32>
    %66 = arith.addf %62, %65 : vector<128x32xf32>
    %cst_42 = arith.constant 0.000000e+00 : f32
    %67 = vector.broadcast %cst_42 : f32 to vector<128x32xf32>
    %68 = arith.maximumf %66, %67 : vector<128x32xf32>
    %c11 = arith.constant 11 : index
    %c0_43 = arith.constant 0 : index
    %c0_44 = arith.constant 0 : index
    %69 = vector.load %arg4[%c11, %c0_43, %c0_44] : memref<15x32x128xf32, #tpu.memory_space<vmem>>, vector<1x32x16xf32>
    %70 = vector.shape_cast %69 : vector<1x32x16xf32> to vector<32x16xf32>
    %cst_45 = arith.constant dense<0.000000e+00> : vector<128x16xf32>
    %71 = tpu.matmul %68, %70, %cst_45 {dimension_numbers = #tpu.dot_dimension_numbers<[1], [0], [0], [1], [0, 0, 1, 1], [], []>} : vector<128x32xf32>, vector<32x16xf32>, vector<128x16xf32> -> vector<128x16xf32>
    %c12 = arith.constant 12 : index
    %c0_46 = arith.constant 0 : index
    %c0_47 = arith.constant 0 : index
    %72 = vector.load %arg4[%c12, %c0_46, %c0_47] : memref<15x32x128xf32, #tpu.memory_space<vmem>>, vector<1x1x16xf32>
    %73 = vector.shape_cast %72 : vector<1x1x16xf32> to vector<1x16xf32>
    %74 = vector.broadcast %73 : vector<1x16xf32> to vector<128x16xf32>
    %75 = arith.addf %71, %74 : vector<128x16xf32>
    %cst_48 = arith.constant 0.000000e+00 : f32
    %76 = vector.broadcast %cst_48 : f32 to vector<128x16xf32>
    %77 = arith.maximumf %75, %76 : vector<128x16xf32>
    %c13 = arith.constant 13 : index
    %c0_49 = arith.constant 0 : index
    %c0_50 = arith.constant 0 : index
    %78 = vector.load %arg4[%c13, %c0_49, %c0_50] : memref<15x32x128xf32, #tpu.memory_space<vmem>>, vector<1x16x128xf32>
    %79 = vector.shape_cast %78 : vector<1x16x128xf32> to vector<16x128xf32>
    %cst_51 = arith.constant dense<0.000000e+00> : vector<128x128xf32>
    %80 = tpu.matmul %77, %79, %cst_51 {dimension_numbers = #tpu.dot_dimension_numbers<[1], [0], [0], [1], [0, 0, 1, 1], [], []>} : vector<128x16xf32>, vector<16x128xf32>, vector<128x128xf32> -> vector<128x128xf32>
    %c14 = arith.constant 14 : index
    %c0_52 = arith.constant 0 : index
    %c0_53 = arith.constant 0 : index
    %81 = vector.load %arg4[%c14, %c0_52, %c0_53] : memref<15x32x128xf32, #tpu.memory_space<vmem>>, vector<1x1x128xf32>
    %82 = vector.shape_cast %81 : vector<1x1x128xf32> to vector<1x128xf32>
    %83 = vector.broadcast %82 : vector<1x128xf32> to vector<128x128xf32>
    %84 = arith.addf %80, %83 : vector<128x128xf32>
    %c0_54 = arith.constant 0 : index
    %c0_55 = arith.constant 0 : index
    %c0_56 = arith.constant 0 : index
    %85 = vector.load %arg5[%c0_54, %c0_55, %c0_56] : memref<1x128x128xf32, #tpu.memory_space<vmem>>, vector<1x128x128xf32>
    %86 = vector.shape_cast %85 : vector<1x128x128xf32> to vector<128x128xf32>
    %87 = vector.shape_cast %84 : vector<128x128xf32> to vector<1x128x128xf32>
    tpu.vector_store %arg5[%c0_54, %c0_55, %c0_56], %87 {strides = array<i32>} : memref<1x128x128xf32, #tpu.memory_space<vmem>>, vector<1x128x128xf32>,
    return
  }
  func.func @transform_0(%arg0: i32) -> (i32, i32, i32) {
    %c0_i32 = arith.constant 0 : i32
    %c0_i32_0 = arith.constant 0 : i32
    %c0_i32_1 = arith.constant 0 : i32
    return %arg0, %c0_i32, %c0_i32_0 : i32, i32, i32
  }
  func.func @transform_1(%arg0: i32) -> (i32, i32, i32) {
    %c0_i32 = arith.constant 0 : i32
    %c0_i32_0 = arith.constant 0 : i32
    %c0_i32_1 = arith.constant 0 : i32
    return %arg0, %c0_i32, %c0_i32_0 : i32, i32, i32
  }
  func.func @transform_2(%arg0: i32) -> (i32, i32, i32) {
    %c0_i32 = arith.constant 0 : i32
    %c0_i32_0 = arith.constant 0 : i32
    %c0_i32_1 = arith.constant 0 : i32
    return %arg0, %c0_i32, %c0_i32_0 : i32, i32, i32
  }
  func.func @transform_3(%arg0: i32) -> (i32, i32, i32) {
    %c0_i32 = arith.constant 0 : i32
    %c0_i32_0 = arith.constant 0 : i32
    %c0_i32_1 = arith.constant 0 : i32
    %c0_i32_2 = arith.constant 0 : i32
    return %c0_i32, %c0_i32_0, %c0_i32_1 : i32, i32, i32
  }
  func.func @transform_4(%arg0: i32) -> (i32, i32, i32) {
    %c0_i32 = arith.constant 0 : i32
    %c0_i32_0 = arith.constant 0 : i32
    %c0_i32_1 = arith.constant 0 : i32
    return %arg0, %c0_i32, %c0_i32_0 : i32, i32, i32
  }
}

</mosaic_0001>

<llo_original>
// kernel: feature_generation_net2_batched.1
$region0: #{feature_generation_net2_batched.1}
  #allocation0 [shape = 'u32[]', space=smem, size = 0x4, offset = 0x4, fixed_abs, tag = 'smem constant byte address 0x4 - core index']
  #allocation1 [shape = 'u32[144,128]{1,0:T(1,128)}', space=vmem, size = 0x12000, scoped, tag = 'internal scratch']
  %s0 = inlined_call_operand.vmem [shape: f32[2,128,1], index: 0, kind: input, shape index: {}]
  %s1 = inlined_call_operand.vmem [shape: f32[2,1,128], index: 1, kind: input, shape index: {}]
  %s2 = inlined_call_operand.vmem [shape: f32[2,128,128], index: 2, kind: input, shape index: {}]
  %s3 = inlined_call_operand.vmem [shape: f32[15,32,128], index: 3, kind: input, shape index: {}]
  %s4 = inlined_call_operand.hbm [shape: f32[2,128,128], index: 4, kind: output, shape index: {}]
  %s5 = sld [smem:[#allocation0]]
  $region49: #{feature_generation_net2_batched.1} parent=0
    _
  %s7 = ssub.s32 1, %s5
  %s8 = scalar_select 0, %s7, %s5
  $region1: #{feature_generation_net2_batched.1} parent=0
    #allocation2 [shape = 'u8[131072]{0}', space=vmem, size = 0x20000, scoped, tag = 'output window, operand 0']
    #allocation3 [shape = 's32[2]{0}', space=sflag, size = 0x8, scoped, tag = 'scoped memory for feature_generation_net2_batched.1']
    %9 = vsyncpa [#allocation3], 0
    %s10 = scalar_lea.sflag [#allocation3], 1
    %11 = vsyncpa %s10, 0
    loop: start=0, step=1, limit=4
    $region2: #{feature_generation_net2_batched.1} parent=1 // loop_pre_header
      _
    $region3: #{feature_generation_net2_batched.1} parent=1 // loop_header
      %s13 = sphi 0, %s17
      %p14 = scmp.ge.s32.totalorder %s13, 4
      %s23 = sphi 0, %s25
      %s26 = sphi 0, %s23
      %s27 = sphi 0, %s26
      %s43 = sphi 0, %s27
      %s49 = sphi 0, %s51
      %s52 = sphi 0, %s49
      %s53 = sphi 0, %s52
      %s69 = sphi 0, %s53
      %s75 = sphi 0, %s77
      %s78 = sphi 0, %s75
      %s79 = sphi 0, %s78
      %s95 = sphi 0, %s79
      %s99 = sphi 0, %s99
      %s101 = sphi 0, %s99
      %s102 = sphi 0, %s101
      %s116 = sphi 0, %s102
      %s122 = sphi 0, %s124
      %s125 = sphi 0, %s122
      %s126 = sphi 0, %s125
      %s142 = sphi 0, %s126
    $region4: #{feature_generation_net2_batched.1} parent=1 // loop_header_branch
      %16 = sbr.rel (%p14) target = $region8
    $region5: #{feature_generation_net2_batched.1} parent=1 // loop_body
      %s18 = ssub.s32 %s13, 1
      %s19 = ssub.s32 %s13, 2
      %s20 = sadd.s32 %s13, 1
      %s21 = ssub.s32 %s13, %s20
      %p22 = scmp.eq.s32.totalorder %s21, 0
      %s24 = sadd.s32 %s23, 1
      %s25 = scalar_select %p22, %s23, %s24
      %p28 = pneg %p22
      %p29 = scmp.eq.s32.totalorder %s13, 1
      %p30 = por %p28, %p29
      %p31 = scmp.ne.s32.totalorder %s23, %s26
      %p32 = scmp.eq.s32.totalorder %s13, 0
      %p33 = por %p31, %p32
      %p34 = scmp.ne.s32.totalorder %s23, %s26
      %p35 = scmp.eq.s32.totalorder %s18, 1
      %p36 = por %p34, %p35
      %p37 = scmp.ne.s32.totalorder %s26, %s27
      %p38 = scmp.eq.s32.totalorder %s18, 0
      %p39 = por %p37, %p38
      %p40 = scmp.ne.s32.totalorder %s26, %s27
      %p41 = scmp.eq.s32.totalorder %s19, 1
      %p42 = por %p40, %p41
      %p44 = scmp.ne.s32.totalorder %s27, %s43
      %p45 = scmp.eq.s32.totalorder %s19, 0
      %p46 = por %p44, %p45
      %s47 = ssub.s32 %s13, %s20
      %p48 = scmp.eq.s32.totalorder %s47, 0
      %s50 = sadd.s32 %s49, 1
      %s51 = scalar_select %p48, %s49, %s50
      %p54 = pneg %p48
      %p55 = scmp.eq.s32.totalorder %s13, 1
      %p56 = por %p54, %p55
      %p57 = scmp.ne.s32.totalorder %s49, %s52
      %p58 = scmp.eq.s32.totalorder %s13, 0
      %p59 = por %p57, %p58
      %p60 = scmp.ne.s32.totalorder %s49, %s52
      %p61 = scmp.eq.s32.totalorder %s18, 1
      %p62 = por %p60, %p61
      %p63 = scmp.ne.s32.totalorder %s52, %s53
      %p64 = scmp.eq.s32.totalorder %s18, 0
      %p65 = por %p63, %p64
      %p66 = scmp.ne.s32.totalorder %s52, %s53
      %p67 = scmp.eq.s32.totalorder %s19, 1
      %p68 = por %p66, %p67
      %p70 = scmp.ne.s32.totalorder %s53, %s69
      %p71 = scmp.eq.s32.totalorder %s19, 0
      %p72 = por %p70, %p71
      %s73 = ssub.s32 %s13, %s20
      %p74 = scmp.eq.s32.totalorder %s73, 0
      %s76 = sadd.s32 %s75, 1
      %s77 = scalar_select %p74, %s75, %s76
      %p80 = pneg %p74
      %p81 = scmp.eq.s32.totalorder %s13, 1
      %p82 = por %p80, %p81
      %p83 = scmp.ne.s32.totalorder %s75, %s78
      %p84 = scmp.eq.s32.totalorder %s13, 0
      %p85 = por %p83, %p84
      %p86 = scmp.ne.s32.totalorder %s75, %s78
      %p87 = scmp.eq.s32.totalorder %s18, 1
      %p88 = por %p86, %p87
      %p89 = scmp.ne.s32.totalorder %s78, %s79
      %p90 = scmp.eq.s32.totalorder %s18, 0
      %p91 = por %p89, %p90
      %p92 = scmp.ne.s32.totalorder %s78, %s79
      %p93 = scmp.eq.s32.totalorder %s19, 1
      %p94 = por %p92, %p93
      %p96 = scmp.ne.s32.totalorder %s79, %s95
      %p97 = scmp.eq.s32.totalorder %s19, 0
      %p98 = por %p96, %p97
      %s100 = sadd.s32 %s99, 1
      %p103 = scmp.eq.s32.totalorder %s13, 1
      %p104 = scmp.ne.s32.totalorder %s99, %s101
      %p105 = scmp.eq.s32.totalorder %s13, 0
      %p106 = por %p104, %p105
      %p107 = scmp.ne.s32.totalorder %s99, %s101
      %p108 = scmp.eq.s32.totalorder %s18, 1
      %p109 = por %p107, %p108
      %p110 = scmp.ne.s32.totalorder %s101, %s102
      %p111 = scmp.eq.s32.totalorder %s18, 0
      %p112 = por %p110, %p111
      %p113 = scmp.ne.s32.totalorder %s101, %s102
      %p114 = scmp.eq.s32.totalorder %s19, 1
      %p115 = por %p113, %p114
      %p117 = scmp.ne.s32.totalorder %s102, %s116
      %p118 = scmp.eq.s32.totalorder %s19, 0
      %p119 = por %p117, %p118
      %s120 = ssub.s32 %s13, %s20
      %p121 = scmp.eq.s32.totalorder %s120, 0
      %s123 = sadd.s32 %s122, 1
      %s124 = scalar_select %p121, %s122, %s123
      %p127 = pneg %p121
      %p128 = scmp.eq.s32.totalorder %s13, 1
      %p129 = por %p127, %p128
      %p130 = scmp.ne.s32.totalorder %s122, %s125
      %p131 = scmp.eq.s32.totalorder %s13, 0
      %p132 = por %p130, %p131
      %p133 = scmp.ne.s32.totalorder %s122, %s125
      %p134 = scmp.eq.s32.totalorder %s18, 1
      %p135 = por %p133, %p134
      %p136 = scmp.ne.s32.totalorder %s125, %s126
      %p137 = scmp.eq.s32.totalorder %s18, 0
      %p138 = por %p136, %p137
      %p139 = scmp.ne.s32.totalorder %s125, %s126
      %p140 = scmp.eq.s32.totalorder %s19, 1
      %p141 = por %p139, %p140
      %p143 = scmp.ne.s32.totalorder %s126, %s142
      %p144 = scmp.eq.s32.totalorder %s19, 0
      %p145 = por %p143, %p144
      %p146 = scmp.le.s32.totalorder 1, %s13
      %p147 = scmp.lt.s32.totalorder %s13, 3
      %p148 = pnand %p146, %p147
      %p149 = pneg %p148
      // Predicated region
      $region9: #{feature_generation_net2_batched.1} parent=5 // pred_check
        _
      $region10: #{feature_generation_net2_batched.1} parent=5 // pred_check_branch
        %151 = sbr.rel (%p148) target = $region12
      $region11: #{feature_generation_net2_batched.1} parent=5 // pred_region
        %s152 = ssub.s32 %s13, 1
        // Predicated region
        $region13: #{feature_generation_net2_batched.1} parent=11 // pred_check
          %p153 = pneg %p112
        $region14: #{feature_generation_net2_batched.1} parent=11 // pred_check_branch
          %155 = sbr.rel (%p153) target = $region16
        $region15: #{feature_generation_net2_batched.1} parent=11 // pred_region
          _
        $region16: #{feature_generation_net2_batched.1} parent=11 // pred_fallthru
          _
      $region12: #{feature_generation_net2_batched.1} parent=5 // pred_fallthru
        _
      %p156 = scmp.lt.s32.totalorder %s13, 2
      // Predicated region
      $region17: #{feature_generation_net2_batched.1} parent=5 // pred_check
        %p157 = pneg %p156
      $region18: #{feature_generation_net2_batched.1} parent=5 // pred_check_branch
        %159 = sbr.rel (%p157) target = $region20
      $region19: #{feature_generation_net2_batched.1} parent=5 // pred_region
        // Predicated region
        $region21: #{feature_generation_net2_batched.1} parent=19 // pred_check
          %p160 = pneg %p33
        $region22: #{feature_generation_net2_batched.1} parent=19 // pred_check_branch
          %162 = sbr.rel (%p160) target = $region24
        $region23: #{feature_generation_net2_batched.1} parent=19 // pred_region
          %p163 = scmp.lt.s32.totalorder %s13, 1
          %s164 = scalar_select %p163, %s13, 1
          %s165 = smul.addr %s164, 16
          %s166 = smul.addr %s165, 8
          %s167 = scalar_lea.vmem %s0, %s166
        $region24: #{feature_generation_net2_batched.1} parent=19 // pred_fallthru
          _
        // Predicated region
        $region25: #{feature_generation_net2_batched.1} parent=19 // pred_check
          %p168 = pneg %p59
        $region26: #{feature_generation_net2_batched.1} parent=19 // pred_check_branch
          %170 = sbr.rel (%p168) target = $region28
        $region27: #{feature_generation_net2_batched.1} parent=19 // pred_region
          %p171 = scmp.lt.s32.totalorder %s13, 1
          %s172 = scalar_select %p171, %s13, 1
          %s173 = scalar_lea.vmem %s1, %s172
        $region28: #{feature_generation_net2_batched.1} parent=19 // pred_fallthru
          _
        // Predicated region
        $region29: #{feature_generation_net2_batched.1} parent=19 // pred_check
          %p174 = pneg %p85
        $region30: #{feature_generation_net2_batched.1} parent=19 // pred_check_branch
          %176 = sbr.rel (%p174) target = $region32
        $region31: #{feature_generation_net2_batched.1} parent=19 // pred_region
          %p177 = scmp.lt.s32.totalorder %s13, 1
          %s178 = scalar_select %p177, %s13, 1
          %s179 = smul.addr %s178, 16
          %s180 = smul.addr %s179, 8
          %s181 = scalar_lea.vmem %s2, %s180
        $region32: #{feature_generation_net2_batched.1} parent=19 // pred_fallthru
          _
      $region20: #{feature_generation_net2_batched.1} parent=5 // pred_fallthru
        _
      %p182 = scmp.le.s32.totalorder 1, %s13
      %p183 = scmp.lt.s32.totalorder %s13, 3
      %p184 = pnand %p182, %p183
      %p185 = pneg %p184
      // Predicated region
      $region33: #{feature_generation_net2_batched.1} parent=5 // pred_check
        _
      $region34: #{feature_generation_net2_batched.1} parent=5 // pred_check_branch
        %187 = sbr.rel (%p184) target = $region36
      $region35: #{feature_generation_net2_batched.1} parent=5 // pred_region
        %s188 = ssub.s32 %s13, 1
        %p189 = scmp.lt.s32.totalorder %s18, 1
        %s190 = scalar_select %p189, %s18, 1
        %s191 = smul.addr %s190, 16
        %s192 = smul.addr %s191, 8
        %s193 = scalar_lea.vmem %s0, %s192
        %p194 = pneg %p39
        %p195 = pneg %p36
        %p196 = scmp.lt.s32.totalorder %s18, 1
        %s197 = scalar_select %p196, %s18, 1
        %s198 = scalar_lea.vmem %s1, %s197
        %p199 = pneg %p65
        %p200 = pneg %p62
        %p201 = scmp.lt.s32.totalorder %s18, 1
        %s202 = scalar_select %p201, %s18, 1
        %s203 = smul.addr %s202, 16
        %s204 = smul.addr %s203, 8
        %s205 = scalar_lea.vmem %s2, %s204
        %p206 = pneg %p91
        %p207 = pneg %p88
        %p208 = pneg %p112
        %p209 = pneg %p109
        %p210 = pneg %p138
        %p211 = pneg %p135
        %s212 = sand.u32 %s125, 1
        %s213 = scalar_lea.sflag [#allocation3], %s212
        %s214 = sand.u32 %s125, 1
        %s215 = smul.addr %s214, 128
        %s216 = scalar_lea.vmem [#allocation2], %s215
        %p217 = scmp.lt.s32.totalorder %s18, 1
        %s218 = scalar_select %p217, %s18, 1
        %s219 = smul.addr %s218, 16
        %s220 = smul.addr %s219, 8
        %s221 = scalar_lea.vmem %s0, %s220
        %p222 = scmp.lt.s32.totalorder %s18, 1
        %s223 = scalar_select %p222, %s18, 1
        %s224 = scalar_lea.vmem %s1, %s223
        %p225 = scmp.lt.s32.totalorder %s18, 1
        %s226 = scalar_select %p225, %s18, 1
        %s227 = smul.addr %s226, 16
        %s228 = smul.addr %s227, 8
        %s229 = scalar_lea.vmem %s2, %s228
        %v230 = vld [vmem:[%s229] sm:$0xff]
        %v231 = vld [vmem:[%s229 + $0x8] sm:$0xff]
        %v232 = vld [vmem:[%s229 + $0x10] sm:$0xff]
        %v233 = vld [vmem:[%s229 + $0x18] sm:$0xff]
        %v234 = vld [vmem:[%s229 + $0x20] sm:$0xff]
        %v235 = vld [vmem:[%s229 + $0x28] sm:$0xff]
        %v236 = vld [vmem:[%s229 + $0x30] sm:$0xff]
        %v237 = vld [vmem:[%s229 + $0x38] sm:$0xff]
        %v238 = vld [vmem:[%s229 + $0x40] sm:$0xff]
        %v239 = vld [vmem:[%s229 + $0x48] sm:$0xff]
        %v240 = vld [vmem:[%s229 + $0x50] sm:$0xff]
        %v241 = vld [vmem:[%s229 + $0x58] sm:$0xff]
        %v242 = vld [vmem:[%s229 + $0x60] sm:$0xff]
        %v243 = vld [vmem:[%s229 + $0x68] sm:$0xff]
        %v244 = vld [vmem:[%s229 + $0x70] sm:$0xff]
        %v245 = vld [vmem:[%s229 + $0x78] sm:$0xff]
        %v246 = vld [vmem:[%s221] sm:$0xff]
        %v247 = vld [vmem:[%s221 + $0x8] sm:$0xff]
        %v248 = vld [vmem:[%s221 + $0x10] sm:$0xff]
        %v249 = vld [vmem:[%s221 + $0x18] sm:$0xff]
        %v250 = vld [vmem:[%s221 + $0x20] sm:$0xff]
        %v251 = vld [vmem:[%s221 + $0x28] sm:$0xff]
        %v252 = vld [vmem:[%s221 + $0x30] sm:$0xff]
        %v253 = vld [vmem:[%s221 + $0x38] sm:$0xff]
        %v254 = vld [vmem:[%s221 + $0x40] sm:$0xff]
        %v255 = vld [vmem:[%s221 + $0x48] sm:$0xff]
        %v256 = vld [vmem:[%s221 + $0x50] sm:$0xff]
        %v257 = vld [vmem:[%s221 + $0x58] sm:$0xff]
        %v258 = vld [vmem:[%s221 + $0x60] sm:$0xff]
        %v259 = vld [vmem:[%s221 + $0x68] sm:$0xff]
        %v260 = vld [vmem:[%s221 + $0x70] sm:$0xff]
        %v261 = vld [vmem:[%s221 + $0x78] sm:$0xff]
        %v262 = vld [vmem:[%s224] sm:$0x1]
        %v264 = vlaneseq
        %v265 = vshrl.u32 %v264, 7
        %v266 = vsub.s32 0, %v265
        %v267 = vrot.slane %v262, %v266
        %v269 = vmul.f32 %v230, %v267
        %v270 = vmul.f32 %v231, %v267
        %v271 = vmul.f32 %v232, %v267
        %v272 = vmul.f32 %v233, %v267
        %v273 = vmul.f32 %v234, %v267
        %v274 = vmul.f32 %v235, %v267
        %v275 = vmul.f32 %v236, %v267
        %v276 = vmul.f32 %v237, %v267
        %v277 = vmul.f32 %v238, %v267
        %v278 = vmul.f32 %v239, %v267
        %v279 = vmul.f32 %v240, %v267
        %v280 = vmul.f32 %v241, %v267
        %v281 = vmul.f32 %v242, %v267
        %v282 = vmul.f32 %v243, %v267
        %v283 = vmul.f32 %v244, %v267
        %v284 = vmul.f32 %v245, %v267
        %285 = vadd.xlane.f32.xlu0 %v269
        %v286 = vpop.xlane.xlu0 %285
        %287 = vadd.xlane.f32.xlu0 %v270
        %v288 = vpop.xlane.xlu0 %287
        %289 = vadd.xlane.f32.xlu0 %v271
        %v290 = vpop.xlane.xlu0 %289
        %291 = vadd.xlane.f32.xlu0 %v272
        %v292 = vpop.xlane.xlu0 %291
        %293 = vadd.xlane.f32.xlu0 %v273
        %v294 = vpop.xlane.xlu0 %293
        %295 = vadd.xlane.f32.xlu0 %v274
        %v296 = vpop.xlane.xlu0 %295
        %297 = vadd.xlane.f32.xlu0 %v275
        %v298 = vpop.xlane.xlu0 %297
        %299 = vadd.xlane.f32.xlu0 %v276
        %v300 = vpop.xlane.xlu0 %299
        %301 = vadd.xlane.f32.xlu0 %v277
        %v302 = vpop.xlane.xlu0 %301
        %303 = vadd.xlane.f32.xlu0 %v278
        %v304 = vpop.xlane.xlu0 %303
        %305 = vadd.xlane.f32.xlu0 %v279
        %v306 = vpop.xlane.xlu0 %305
        %307 = vadd.xlane.f32.xlu0 %v280
        %v308 = vpop.xlane.xlu0 %307
        %309 = vadd.xlane.f32.xlu0 %v281
        %v310 = vpop.xlane.xlu0 %309
        %311 = vadd.xlane.f32.xlu0 %v282
        %v312 = vpop.xlane.xlu0 %311
        %313 = vadd.xlane.f32.xlu0 %v283
        %v314 = vpop.xlane.xlu0 %313
        %315 = vadd.xlane.f32.xlu0 %v284
        %v316 = vpop.xlane.xlu0 %315
        %v317 = vld [vmem:[%s3] sm:$0x1]
        %319 = vset.pattern.permute.xlu0 0
        %320 = vperm.xlu0 %319, %v246
        %v321 = vpop.permute.xlu0 %320
        %324 = vset.pattern.permute.xlu0 0
        %325 = vperm.xlu0 %324, %v247
        %v326 = vpop.permute.xlu0 %325
        %329 = vset.pattern.permute.xlu0 0
        %330 = vperm.xlu0 %329, %v248
        %v331 = vpop.permute.xlu0 %330
        %334 = vset.pattern.permute.xlu0 0
        %335 = vperm.xlu0 %334, %v249
        %v336 = vpop.permute.xlu0 %335
        %339 = vset.pattern.permute.xlu0 0
        %340 = vperm.xlu0 %339, %v250
        %v341 = vpop.permute.xlu0 %340
        %344 = vset.pattern.permute.xlu0 0
        %345 = vperm.xlu0 %344, %v251
        %v346 = vpop.permute.xlu0 %345
        %349 = vset.pattern.permute.xlu0 0
        %350 = vperm.xlu0 %349, %v252
        %v351 = vpop.permute.xlu0 %350
        %354 = vset.pattern.permute.xlu0 0
        %355 = vperm.xlu0 %354, %v253
        %v356 = vpop.permute.xlu0 %355
        %359 = vset.pattern.permute.xlu0 0
        %360 = vperm.xlu0 %359, %v254
        %v361 = vpop.permute.xlu0 %360
        %364 = vset.pattern.permute.xlu0 0
        %365 = vperm.xlu0 %364, %v255
        %v366 = vpop.permute.xlu0 %365
        %369 = vset.pattern.permute.xlu0 0
        %370 = vperm.xlu0 %369, %v256
        %v371 = vpop.permute.xlu0 %370
        %374 = vset.pattern.permute.xlu0 0
        %375 = vperm.xlu0 %374, %v257
        %v376 = vpop.permute.xlu0 %375
        %379 = vset.pattern.permute.xlu0 0
        %380 = vperm.xlu0 %379, %v258
        %v381 = vpop.permute.xlu0 %380
        %384 = vset.pattern.permute.xlu0 0
        %385 = vperm.xlu0 %384, %v259
        %v386 = vpop.permute.xlu0 %385
        %389 = vset.pattern.permute.xlu0 0
        %390 = vperm.xlu0 %389, %v260
        %v391 = vpop.permute.xlu0 %390
        %394 = vset.pattern.permute.xlu0 0
        %395 = vperm.xlu0 %394, %v261
        %v396 = vpop.permute.xlu0 %395
        %v398 = vlaneseq
        %v399 = vshrl.u32 %v398, 7
        %v400 = vsub.s32 0, %v399
        %v401 = vrot.slane %v317, %v400
        %v402 = vmul.f32 %v321, %v401
        %v403 = vmul.f32 %v326, %v401
        %v404 = vmul.f32 %v331, %v401
        %v405 = vmul.f32 %v336, %v401
        %v406 = vmul.f32 %v341, %v401
        %v407 = vmul.f32 %v346, %v401
        %v408 = vmul.f32 %v351, %v401
        %v409 = vmul.f32 %v356, %v401
        %v410 = vmul.f32 %v361, %v401
        %v411 = vmul.f32 %v366, %v401
        %v412 = vmul.f32 %v371, %v401
        %v413 = vmul.f32 %v376, %v401
        %v414 = vmul.f32 %v381, %v401
        %v415 = vmul.f32 %v386, %v401
        %v416 = vmul.f32 %v391, %v401
        %v417 = vmul.f32 %v396, %v401
        %s418 = scalar_lea.vmem %s3, 32
        %v419 = vld [vmem:[%s418] sm:$0x1]
        %v420 = vlaneseq
        %v421 = vshrl.u32 %v420, 7
        %v422 = vsub.s32 0, %v421
        %v423 = vrot.slane %v419, %v422
        %v424 = vmul.f32 %v286, %v423
        %v425 = vmul.f32 %v288, %v423
        %v426 = vmul.f32 %v290, %v423
        %v427 = vmul.f32 %v292, %v423
        %v428 = vmul.f32 %v294, %v423
        %v429 = vmul.f32 %v296, %v423
        %v430 = vmul.f32 %v298, %v423
        %v431 = vmul.f32 %v300, %v423
        %v432 = vmul.f32 %v302, %v423
        %v433 = vmul.f32 %v304, %v423
        %v434 = vmul.f32 %v306, %v423
        %v435 = vmul.f32 %v308, %v423
        %v436 = vmul.f32 %v310, %v423
        %v437 = vmul.f32 %v312, %v423
        %v438 = vmul.f32 %v314, %v423
        %v439 = vmul.f32 %v316, %v423
        %v440 = vadd.f32 %v402, %v424
        %v441 = vadd.f32 %v403, %v425
        %v442 = vadd.f32 %v404, %v426
        %v443 = vadd.f32 %v405, %v427
        %v444 = vadd.f32 %v406, %v428
        %v445 = vadd.f32 %v407, %v429
        %v446 = vadd.f32 %v408, %v430
        %v447 = vadd.f32 %v409, %v431
        %v448 = vadd.f32 %v410, %v432
        %v449 = vadd.f32 %v411, %v433
        %v450 = vadd.f32 %v412, %v434
        %v451 = vadd.f32 %v413, %v435
        %v452 = vadd.f32 %v414, %v436
        %v453 = vadd.f32 %v415, %v437
        %v454 = vadd.f32 %v416, %v438
        %v455 = vadd.f32 %v417, %v439
        %s456 = scalar_lea.vmem %s3, 64
        %v457 = vld [vmem:[%s456] sm:$0x1]
        %v458 = vlaneseq
        %v459 = vshrl.u32 %v458, 7
        %v460 = vsub.s32 0, %v459
        %v461 = vrot.slane %v457, %v460
        %v462 = vadd.f32 %v440, %v461
        %v463 = vadd.f32 %v441, %v461
        %v464 = vadd.f32 %v442, %v461
        %v465 = vadd.f32 %v443, %v461
        %v466 = vadd.f32 %v444, %v461
        %v467 = vadd.f32 %v445, %v461
        %v468 = vadd.f32 %v446, %v461
        %v469 = vadd.f32 %v447, %v461
        %v470 = vadd.f32 %v448, %v461
        %v471 = vadd.f32 %v449, %v461
        %v472 = vadd.f32 %v450, %v461
        %v473 = vadd.f32 %v451, %v461
        %v474 = vadd.f32 %v452, %v461
        %v475 = vadd.f32 %v453, %v461
        %v476 = vadd.f32 %v454, %v461
        %v477 = vadd.f32 %v455, %v461
        %v478 = vmax.f32 %v462, 0.0
        %v479 = vmax.f32 %v463, 0.0
        %v480 = vmax.f32 %v464, 0.0
        %v481 = vmax.f32 %v465, 0.0
        %v482 = vmax.f32 %v466, 0.0
        %v483 = vmax.f32 %v467, 0.0
        %v484 = vmax.f32 %v468, 0.0
        %v485 = vmax.f32 %v469, 0.0
        %v486 = vmax.f32 %v470, 0.0
        %v487 = vmax.f32 %v471, 0.0
        %v488 = vmax.f32 %v472, 0.0
        %v489 = vmax.f32 %v473, 0.0
        %v490 = vmax.f32 %v474, 0.0
        %v491 = vmax.f32 %v475, 0.0
        %v492 = vmax.f32 %v476, 0.0
        %v493 = vmax.f32 %v477, 0.0
        %494 = vmatprep.subr.mxu0 0.0
        %495 = vmatpush1.msra.mxu0 %v493
        %496 = vmatprep.subr.mxu0 0.0
        %497 = vmatpush1.msra.mxu0 %v492
        %498 = vmatprep.subr.mxu0 0.0
        %499 = vmatpush1.msra.mxu0 %v491
        %500 = vmatprep.subr.mxu0 0.0
        %501 = vmatpush1.msra.mxu0 %v490
        %502 = vmatprep.subr.mxu0 0.0
        %503 = vmatpush1.msra.mxu0 %v489
        %504 = vmatprep.subr.mxu0 0.0
        %505 = vmatpush1.msra.mxu0 %v488
        %506 = vmatprep.subr.mxu0 0.0
        %507 = vmatpush1.msra.mxu0 %v487
        %508 = vmatprep.subr.mxu0 0.0
        %509 = vmatpush1.msra.mxu0 %v486
        %510 = vmatprep.subr.mxu0 0.0
        %511 = vmatpush1.msra.mxu0 %v485
        %512 = vmatprep.subr.mxu0 0.0
        %513 = vmatpush1.msra.mxu0 %v484
        %514 = vmatprep.subr.mxu0 0.0
        %515 = vmatpush1.msra.mxu0 %v483
        %516 = vmatprep.subr.mxu0 0.0
        %517 = vmatpush1.msra.mxu0 %v482
        %518 = vmatprep.subr.mxu0 0.0
        %519 = vmatpush1.msra.mxu0 %v481
        %520 = vmatprep.subr.mxu0 0.0
        %521 = vmatpush1.msra.mxu0 %v480
        %522 = vmatprep.subr.mxu0 0.0
        %523 = vmatpush1.msra.mxu0 %v479
        %524 = vmatprep.subr.mxu0 0.0
        %525 = vmatpush1.msra.mxu0 %v478
        %526 = vmatprep.subr.mxu0 0.0
        %527 = vmatpush2.msra.mxu0 0.0
        %528 = vmatprep.subr.mxu0 0.0
        %529 = vmatpush2.msra.mxu0 0.0
        %530 = vmatprep.subr.mxu0 0.0
        %531 = vmatpush2.msra.mxu0 0.0
        %532 = vmatprep.subr.mxu0 0.0
        %533 = vmatpush2.msra.mxu0 0.0
        %534 = vmatprep.subr.mxu0 0.0
        %535 = vmatpush2.msra.mxu0 0.0
        %536 = vmatprep.subr.mxu0 0.0
        %537 = vmatpush2.msra.mxu0 0.0
        %538 = vmatprep.subr.mxu0 0.0
        %539 = vmatpush2.msra.mxu0 0.0
        %540 = vmatprep.subr.mxu0 0.0
        %541 = vmatpush2.msra.mxu0 0.0
        %542 = vmatprep.subr.mxu0 0.0
        %543 = vmatpush2.msra.mxu0 0.0
        %544 = vmatprep.subr.mxu0 0.0
        %545 = vmatpush2.msra.mxu0 0.0
        %546 = vmatprep.subr.mxu0 0.0
        %547 = vmatpush2.msra.mxu0 0.0
        %548 = vmatprep.subr.mxu0 0.0
        %549 = vmatpush2.msra.mxu0 0.0
        %550 = vmatprep.subr.mxu0 0.0
        %551 = vmatpush2.msra.mxu0 0.0
        %552 = vmatprep.subr.mxu0 0.0
        %553 = vmatpush2.msra.mxu0 0.0
        %554 = vmatprep.subr.mxu0 0.0
        %555 = vmatpush2.msra.mxu0 0.0
        %556 = vmatprep.subr.mxu0 0.0
        %557 = vmatpush2.msra.mxu0 0.0
        %558 = vmatprep.mubr.f32.mxu0 0.0
        %559 = vmatmul.mubr.f32.gmra.mxu0 %v230
        %v560 = vpop.f32.mrf.mxu0
        %v561 = vadd.f32 0.0, %v560
        %v562 = vpop.f32.mrf.mxu0
        %563 = vmatprep.mubr.f32.mxu0 0.0
        %564 = vmatmul.mubr.f32.gmra.mxu0 %v231
        %v565 = vpop.f32.mrf.mxu0
        %v566 = vadd.f32 0.0, %v565
        %v567 = vpop.f32.mrf.mxu0
        %568 = vmatprep.mubr.f32.mxu0 0.0
        %569 = vmatmul.mubr.f32.gmra.mxu0 %v232
        %v570 = vpop.f32.mrf.mxu0
        %v571 = vadd.f32 0.0, %v570
        %v572 = vpop.f32.mrf.mxu0
        %573 = vmatprep.mubr.f32.mxu0 0.0
        %574 = vmatmul.mubr.f32.gmra.mxu0 %v233
        %v575 = vpop.f32.mrf.mxu0
        %v576 = vadd.f32 0.0, %v575
        %v577 = vpop.f32.mrf.mxu0
        %578 = vmatprep.mubr.f32.mxu0 0.0
        %579 = vmatmul.mubr.f32.gmra.mxu0 %v234
        %v580 = vpop.f32.mrf.mxu0
        %v581 = vadd.f32 0.0, %v580
        %v582 = vpop.f32.mrf.mxu0
        %583 = vmatprep.mubr.f32.mxu0 0.0
        %584 = vmatmul.mubr.f32.gmra.mxu0 %v235
        %v585 = vpop.f32.mrf.mxu0
        %v586 = vadd.f32 0.0, %v585
        %v587 = vpop.f32.mrf.mxu0
        %588 = vmatprep.mubr.f32.mxu0 0.0
        %589 = vmatmul.mubr.f32.gmra.mxu0 %v236
        %v590 = vpop.f32.mrf.mxu0
        %v591 = vadd.f32 0.0, %v590
        %v592 = vpop.f32.mrf.mxu0
        %593 = vmatprep.mubr.f32.mxu0 0.0
        %594 = vmatmul.mubr.f32.gmra.mxu0 %v237
        %v595 = vpop.f32.mrf.mxu0
        %v596 = vadd.f32 0.0, %v595
        %v597 = vpop.f32.mrf.mxu0
        %598 = vmatprep.mubr.f32.mxu0 0.0
        %599 = vmatmul.mubr.f32.gmra.mxu0 %v238
        %v600 = vpop.f32.mrf.mxu0
        %v601 = vadd.f32 0.0, %v600
        %v602 = vpop.f32.mrf.mxu0
        %603 = vmatprep.mubr.f32.mxu0 0.0
        %604 = vmatmul.mubr.f32.gmra.mxu0 %v239
        %v605 = vpop.f32.mrf.mxu0
        %v606 = vadd.f32 0.0, %v605
        %v607 = vpop.f32.mrf.mxu0
        %608 = vmatprep.mubr.f32.mxu0 0.0
        %609 = vmatmul.mubr.f32.gmra.mxu0 %v240
        %v610 = vpop.f32.mrf.mxu0
        %v611 = vadd.f32 0.0, %v610
        %v612 = vpop.f32.mrf.mxu0
        %613 = vmatprep.mubr.f32.mxu0 0.0
        %614 = vmatmul.mubr.f32.gmra.mxu0 %v241
        %v615 = vpop.f32.mrf.mxu0
        %v616 = vadd.f32 0.0, %v615
        %v617 = vpop.f32.mrf.mxu0
        %618 = vmatprep.mubr.f32.mxu0 0.0
        %619 = vmatmul.mubr.f32.gmra.mxu0 %v242
        %v620 = vpop.f32.mrf.mxu0
        %v621 = vadd.f32 0.0, %v620
        %v622 = vpop.f32.mrf.mxu0
        %623 = vmatprep.mubr.f32.mxu0 0.0
        %624 = vmatmul.mubr.f32.gmra.mxu0 %v243
        %v625 = vpop.f32.mrf.mxu0
        %v626 = vadd.f32 0.0, %v625
        %v627 = vpop.f32.mrf.mxu0
        %628 = vmatprep.mubr.f32.mxu0 0.0
        %629 = vmatmul.mubr.f32.gmra.mxu0 %v244
        %v630 = vpop.f32.mrf.mxu0
        %v631 = vadd.f32 0.0, %v630
        %v632 = vpop.f32.mrf.mxu0
        %633 = vmatprep.mubr.f32.mxu0 0.0
        %634 = vmatmul.mubr.f32.gmra.mxu0 %v245
        %v635 = vpop.f32.mrf.mxu0
        %v636 = vadd.f32 0.0, %v635
        %v637 = vpop.f32.mrf.mxu0
        %638 = vdwg.mxu0
        %655 = vrot.lane.b32.xlu0 %v561, 8
        %v656 = vpop.permute.xlu0 %655
        %657 = vrot.lane.b32.xlu0 %v566, 8
        %v658 = vpop.permute.xlu0 %657
        %659 = vrot.lane.b32.xlu0 %v571, 8
        %v660 = vpop.permute.xlu0 %659
        %661 = vrot.lane.b32.xlu0 %v576, 8
        %v662 = vpop.permute.xlu0 %661
        %663 = vrot.lane.b32.xlu0 %v581, 8
        %v664 = vpop.permute.xlu0 %663
        %665 = vrot.lane.b32.xlu0 %v586, 8
        %v666 = vpop.permute.xlu0 %665
        %667 = vrot.lane.b32.xlu0 %v591, 8
        %v668 = vpop.permute.xlu0 %667
        %669 = vrot.lane.b32.xlu0 %v596, 8
        %v670 = vpop.permute.xlu0 %669
        %671 = vrot.lane.b32.xlu0 %v601, 8
        %v672 = vpop.permute.xlu0 %671
        %673 = vrot.lane.b32.xlu0 %v606, 8
        %v674 = vpop.permute.xlu0 %673
        %675 = vrot.lane.b32.xlu0 %v611, 8
        %v676 = vpop.permute.xlu0 %675
        %677 = vrot.lane.b32.xlu0 %v616, 8
        %v678 = vpop.permute.xlu0 %677
        %679 = vrot.lane.b32.xlu0 %v621, 8
        %v680 = vpop.permute.xlu0 %679
        %681 = vrot.lane.b32.xlu0 %v626, 8
        %v682 = vpop.permute.xlu0 %681
        %683 = vrot.lane.b32.xlu0 %v631, 8
        %v684 = vpop.permute.xlu0 %683
        %685 = vrot.lane.b32.xlu0 %v636, 8
        %v686 = vpop.permute.xlu0 %685
        %vm703 = vcmask 64512
        %v704 = vsel %vm703, %v478, %v656
        %v705 = vsel %vm703, %v479, %v658
        %v706 = vsel %vm703, %v480, %v660
        %v707 = vsel %vm703, %v481, %v662
        %v708 = vsel %vm703, %v482, %v664
        %v709 = vsel %vm703, %v483, %v666
        %v710 = vsel %vm703, %v484, %v668
        %v711 = vsel %vm703, %v485, %v670
        %v712 = vsel %vm703, %v486, %v672
        %v713 = vsel %vm703, %v487, %v674
        %v714 = vsel %vm703, %v488, %v676
        %v715 = vsel %vm703, %v489, %v678
        %v716 = vsel %vm703, %v490, %v680
        %v717 = vsel %vm703, %v491, %v682
        %v718 = vsel %vm703, %v492, %v684
        %v719 = vsel %vm703, %v493, %v686
        %s720 = scalar_lea.vmem %s3, 96
        %v721 = vld [vmem:[%s720] sm:$0xff]
        %v722 = vld [vmem:[%s720 + $0x8] sm:$0xff]
        %s723 = scalar_lea.vmem %s3, 128
        %v724 = vld [vmem:[%s723] sm:$0x1]
        %v725 = vlaneseq
        %v726 = vshrl.u32 %v725, 7
        %v727 = vsub.s32 0, %v726
        %v728 = vrot.slane %v724, %v727
        %vm729 = vcmask 130048
        %v731 = vsel %vm729, %v704, 0
        %v734 = vsel %vm729, %v705, 0
        %v737 = vsel %vm729, %v706, 0
        %v740 = vsel %vm729, %v707, 0
        %v743 = vsel %vm729, %v708, 0
        %v746 = vsel %vm729, %v709, 0
        %v749 = vsel %vm729, %v710, 0
        %v752 = vsel %vm729, %v711, 0
        %v755 = vsel %vm729, %v712, 0
        %v758 = vsel %vm729, %v713, 0
        %v761 = vsel %vm729, %v714, 0
        %v764 = vsel %vm729, %v715, 0
        %v767 = vsel %vm729, %v716, 0
        %v770 = vsel %vm729, %v717, 0
        %v773 = vsel %vm729, %v718, 0
        %v776 = vsel %vm729, %v719, 0
        %778 = vmatprep.subr.mxu0 0.0
        %779 = vmatpush1.msra.mxu0 0.0
        %780 = vmatprep.subr.mxu0 0.0
        %781 = vmatpush1.msra.mxu0 0.0
        %782 = vmatprep.subr.mxu0 0.0
        %783 = vmatpush1.msra.mxu0 0.0
        %784 = vmatprep.subr.mxu0 0.0
        %785 = vmatpush1.msra.mxu0 0.0
        %786 = vmatprep.subr.mxu0 0.0
        %787 = vmatpush1.msra.mxu0 0.0
        %788 = vmatprep.subr.mxu0 0.0
        %789 = vmatpush1.msra.mxu0 0.0
        %790 = vmatprep.subr.mxu0 0.0
        %791 = vmatpush1.msra.mxu0 0.0
        %792 = vmatprep.subr.mxu0 0.0
        %793 = vmatpush1.msra.mxu0 0.0
        %794 = vmatprep.subr.mxu0 0.0
        %795 = vmatpush1.msra.mxu0 0.0
        %796 = vmatprep.subr.mxu0 0.0
        %797 = vmatpush1.msra.mxu0 0.0
        %798 = vmatprep.subr.mxu0 0.0
        %799 = vmatpush1.msra.mxu0 0.0
        %800 = vmatprep.subr.mxu0 0.0
        %801 = vmatpush1.msra.mxu0 0.0
        %802 = vmatprep.subr.mxu0 0.0
        %803 = vmatpush1.msra.mxu0 0.0
        %804 = vmatprep.subr.mxu0 0.0
        %805 = vmatpush1.msra.mxu0 0.0
        %806 = vmatprep.subr.mxu0 0.0
        %807 = vmatpush1.msra.mxu0 %v722
        %808 = vmatprep.subr.mxu0 0.0
        %809 = vmatpush1.msra.mxu0 %v721
        %810 = vmatprep.subr.mxu0 0.0
        %811 = vmatpush2.msra.mxu0 0.0
        %812 = vmatprep.subr.mxu0 0.0
        %813 = vmatpush2.msra.mxu0 0.0
        %814 = vmatprep.subr.mxu0 0.0
        %815 = vmatpush2.msra.mxu0 0.0
        %816 = vmatprep.subr.mxu0 0.0
        %817 = vmatpush2.msra.mxu0 0.0
        %818 = vmatprep.subr.mxu0 0.0
        %819 = vmatpush2.msra.mxu0 0.0
        %820 = vmatprep.subr.mxu0 0.0
        %821 = vmatpush2.msra.mxu0 0.0
        %822 = vmatprep.subr.mxu0 0.0
        %823 = vmatpush2.msra.mxu0 0.0
        %824 = vmatprep.subr.mxu0 0.0
        %825 = vmatpush2.msra.mxu0 0.0
        %826 = vmatprep.subr.mxu0 0.0
        %827 = vmatpush2.msra.mxu0 0.0
        %828 = vmatprep.subr.mxu0 0.0
        %829 = vmatpush2.msra.mxu0 0.0
        %830 = vmatprep.subr.mxu0 0.0
        %831 = vmatpush2.msra.mxu0 0.0
        %832 = vmatprep.subr.mxu0 0.0
        %833 = vmatpush2.msra.mxu0 0.0
        %834 = vmatprep.subr.mxu0 0.0
        %835 = vmatpush2.msra.mxu0 0.0
        %836 = vmatprep.subr.mxu0 0.0
        %837 = vmatpush2.msra.mxu0 0.0
        %838 = vmatprep.subr.mxu0 0.0
        %839 = vmatpush2.msra.mxu0 0.0
        %840 = vmatprep.subr.mxu0 0.0
        %841 = vmatpush2.msra.mxu0 0.0
        %842 = vmatprep.mubr.f32.mxu0 0.0
        %843 = vmatmul.mubr.f32.gmra.mxu0 %v731
        %v844 = vpop.f32.mrf.mxu0
        %v845 = vadd.f32 %v728, %v844
        %v846 = vpop.f32.mrf.mxu0
        %847 = vmatprep.mubr.f32.mxu0 0.0
        %848 = vmatmul.mubr.f32.gmra.mxu0 %v734
        %v849 = vpop.f32.mrf.mxu0
        %v850 = vadd.f32 %v728, %v849
        %v851 = vpop.f32.mrf.mxu0
        %852 = vmatprep.mubr.f32.mxu0 0.0
        %853 = vmatmul.mubr.f32.gmra.mxu0 %v737
        %v854 = vpop.f32.mrf.mxu0
        %v855 = vadd.f32 %v728, %v854
        %v856 = vpop.f32.mrf.mxu0
        %857 = vmatprep.mubr.f32.mxu0 0.0
        %858 = vmatmul.mubr.f32.gmra.mxu0 %v740
        %v859 = vpop.f32.mrf.mxu0
        %v860 = vadd.f32 %v728, %v859
        %v861 = vpop.f32.mrf.mxu0
        %862 = vmatprep.mubr.f32.mxu0 0.0
        %863 = vmatmul.mubr.f32.gmra.mxu0 %v743
        %v864 = vpop.f32.mrf.mxu0
        %v865 = vadd.f32 %v728, %v864
        %v866 = vpop.f32.mrf.mxu0
        %867 = vmatprep.mubr.f32.mxu0 0.0
        %868 = vmatmul.mubr.f32.gmra.mxu0 %v746
        %v869 = vpop.f32.mrf.mxu0
        %v870 = vadd.f32 %v728, %v869
        %v871 = vpop.f32.mrf.mxu0
        %872 = vmatprep.mubr.f32.mxu0 0.0
        %873 = vmatmul.mubr.f32.gmra.mxu0 %v749
        %v874 = vpop.f32.mrf.mxu0
        %v875 = vadd.f32 %v728, %v874
        %v876 = vpop.f32.mrf.mxu0
        %877 = vmatprep.mubr.f32.mxu0 0.0
        %878 = vmatmul.mubr.f32.gmra.mxu0 %v752
        %v879 = vpop.f32.mrf.mxu0
        %v880 = vadd.f32 %v728, %v879
        %v881 = vpop.f32.mrf.mxu0
        %882 = vmatprep.mubr.f32.mxu0 0.0
        %883 = vmatmul.mubr.f32.gmra.mxu0 %v755
        %v884 = vpop.f32.mrf.mxu0
        %v885 = vadd.f32 %v728, %v884
        %v886 = vpop.f32.mrf.mxu0
        %887 = vmatprep.mubr.f32.mxu0 0.0
        %888 = vmatmul.mubr.f32.gmra.mxu0 %v758
        %v889 = vpop.f32.mrf.mxu0
        %v890 = vadd.f32 %v728, %v889
        %v891 = vpop.f32.mrf.mxu0
        %892 = vmatprep.mubr.f32.mxu0 0.0
        %893 = vmatmul.mubr.f32.gmra.mxu0 %v761
        %v894 = vpop.f32.mrf.mxu0
        %v895 = vadd.f32 %v728, %v894
        %v896 = vpop.f32.mrf.mxu0
        %897 = vmatprep.mubr.f32.mxu0 0.0
        %898 = vmatmul.mubr.f32.gmra.mxu0 %v764
        %v899 = vpop.f32.mrf.mxu0
        %v900 = vadd.f32 %v728, %v899
        %v901 = vpop.f32.mrf.mxu0
        %902 = vmatprep.mubr.f32.mxu0 0.0
        %903 = vmatmul.mubr.f32.gmra.mxu0 %v767
        %v904 = vpop.f32.mrf.mxu0
        %v905 = vadd.f32 %v728, %v904
        %v906 = vpop.f32.mrf.mxu0
        %907 = vmatprep.mubr.f32.mxu0 0.0
        %908 = vmatmul.mubr.f32.gmra.mxu0 %v770
        %v909 = vpop.f32.mrf.mxu0
        %v910 = vadd.f32 %v728, %v909
        %v911 = vpop.f32.mrf.mxu0
        %912 = vmatprep.mubr.f32.mxu0 0.0
        %913 = vmatmul.mubr.f32.gmra.mxu0 %v773
        %v914 = vpop.f32.mrf.mxu0
        %v915 = vadd.f32 %v728, %v914
        %v916 = vpop.f32.mrf.mxu0
        %917 = vmatprep.mubr.f32.mxu0 0.0
        %918 = vmatmul.mubr.f32.gmra.mxu0 %v776
        %v919 = vpop.f32.mrf.mxu0
        %v920 = vadd.f32 %v728, %v919
        %v921 = vpop.f32.mrf.mxu0
        %922 = vdwg.mxu0
        %v923 = vmax.f32 %v845, 0.0
        %v924 = vmax.f32 %v850, 0.0
        %v925 = vmax.f32 %v855, 0.0
        %v926 = vmax.f32 %v860, 0.0
        %v927 = vmax.f32 %v865, 0.0
        %v928 = vmax.f32 %v870, 0.0
        %v929 = vmax.f32 %v875, 0.0
        %v930 = vmax.f32 %v880, 0.0
        %v931 = vmax.f32 %v885, 0.0
        %v932 = vmax.f32 %v890, 0.0
        %v933 = vmax.f32 %v895, 0.0
        %v934 = vmax.f32 %v900, 0.0
        %v935 = vmax.f32 %v905, 0.0
        %v936 = vmax.f32 %v910, 0.0
        %v937 = vmax.f32 %v915, 0.0
        %v938 = vmax.f32 %v920, 0.0
        %939 = vmatprep.subr.mxu0 0.0
        %940 = vmatpush1.msra.mxu0 %v938
        %941 = vmatprep.subr.mxu0 0.0
        %942 = vmatpush1.msra.mxu0 %v937
        %943 = vmatprep.subr.mxu0 0.0
        %944 = vmatpush1.msra.mxu0 %v936
        %945 = vmatprep.subr.mxu0 0.0
        %946 = vmatpush1.msra.mxu0 %v935
        %947 = vmatprep.subr.mxu0 0.0
        %948 = vmatpush1.msra.mxu0 %v934
        %949 = vmatprep.subr.mxu0 0.0
        %950 = vmatpush1.msra.mxu0 %v933
        %951 = vmatprep.subr.mxu0 0.0
        %952 = vmatpush1.msra.mxu0 %v932
        %953 = vmatprep.subr.mxu0 0.0
        %954 = vmatpush1.msra.mxu0 %v931
        %955 = vmatprep.subr.mxu0 0.0
        %956 = vmatpush1.msra.mxu0 %v930
        %957 = vmatprep.subr.mxu0 0.0
        %958 = vmatpush1.msra.mxu0 %v929
        %959 = vmatprep.subr.mxu0 0.0
        %960 = vmatpush1.msra.mxu0 %v928
        %961 = vmatprep.subr.mxu0 0.0
        %962 = vmatpush1.msra.mxu0 %v927
        %963 = vmatprep.subr.mxu0 0.0
        %964 = vmatpush1.msra.mxu0 %v926
        %965 = vmatprep.subr.mxu0 0.0
        %966 = vmatpush1.msra.mxu0 %v925
        %967 = vmatprep.subr.mxu0 0.0
        %968 = vmatpush1.msra.mxu0 %v924
        %969 = vmatprep.subr.mxu0 0.0
        %970 = vmatpush1.msra.mxu0 %v923
        %971 = vmatprep.subr.mxu0 0.0
        %972 = vmatpush2.msra.mxu0 0.0
        %973 = vmatprep.subr.mxu0 0.0
        %974 = vmatpush2.msra.mxu0 0.0
        %975 = vmatprep.subr.mxu0 0.0
        %976 = vmatpush2.msra.mxu0 0.0
        %977 = vmatprep.subr.mxu0 0.0
        %978 = vmatpush2.msra.mxu0 0.0
        %979 = vmatprep.subr.mxu0 0.0
        %980 = vmatpush2.msra.mxu0 0.0
        %981 = vmatprep.subr.mxu0 0.0
        %982 = vmatpush2.msra.mxu0 0.0
        %983 = vmatprep.subr.mxu0 0.0
        %984 = vmatpush2.msra.mxu0 0.0
        %985 = vmatprep.subr.mxu0 0.0
        %986 = vmatpush2.msra.mxu0 0.0
        %987 = vmatprep.subr.mxu0 0.0
        %988 = vmatpush2.msra.mxu0 0.0
        %989 = vmatprep.subr.mxu0 0.0
        %990 = vmatpush2.msra.mxu0 0.0
        %991 = vmatprep.subr.mxu0 0.0
        %992 = vmatpush2.msra.mxu0 0.0
        %993 = vmatprep.subr.mxu0 0.0
        %994 = vmatpush2.msra.mxu0 0.0
        %995 = vmatprep.subr.mxu0 0.0
        %996 = vmatpush2.msra.mxu0 0.0
        %997 = vmatprep.subr.mxu0 0.0
        %998 = vmatpush2.msra.mxu0 0.0
        %999 = vmatprep.subr.mxu0 0.0
        %1000 = vmatpush2.msra.mxu0 0.0
        %1001 = vmatprep.subr.mxu0 0.0
        %1002 = vmatpush2.msra.mxu0 0.0
        %1003 = vmatprep.mubr.f32.mxu0 0.0
        %1004 = vmatmul.mubr.f32.gmra.mxu0 %v230
        %v1005 = vpop.f32.mrf.mxu0
        %v1006 = vadd.f32 0.0, %v1005
        %v1007 = vpop.f32.mrf.mxu0
        %1008 = vmatprep.mubr.f32.mxu0 0.0
        %1009 = vmatmul.mubr.f32.gmra.mxu0 %v231
        %v1010 = vpop.f32.mrf.mxu0
        %v1011 = vadd.f32 0.0, %v1010
        %v1012 = vpop.f32.mrf.mxu0
        %1013 = vmatprep.mubr.f32.mxu0 0.0
        %1014 = vmatmul.mubr.f32.gmra.mxu0 %v232
        %v1015 = vpop.f32.mrf.mxu0
        %v1016 = vadd.f32 0.0, %v1015
        %v1017 = vpop.f32.mrf.mxu0
        %1018 = vmatprep.mubr.f32.mxu0 0.0
        %1019 = vmatmul.mubr.f32.gmra.mxu0 %v233
        %v1020 = vpop.f32.mrf.mxu0
        %v1021 = vadd.f32 0.0, %v1020
        %v1022 = vpop.f32.mrf.mxu0
        %1023 = vmatprep.mubr.f32.mxu0 0.0
        %1024 = vmatmul.mubr.f32.gmra.mxu0 %v234
        %v1025 = vpop.f32.mrf.mxu0
        %v1026 = vadd.f32 0.0, %v1025
        %v1027 = vpop.f32.mrf.mxu0
        %1028 = vmatprep.mubr.f32.mxu0 0.0
        %1029 = vmatmul.mubr.f32.gmra.mxu0 %v235
        %v1030 = vpop.f32.mrf.mxu0
        %v1031 = vadd.f32 0.0, %v1030
        %v1032 = vpop.f32.mrf.mxu0
        %1033 = vmatprep.mubr.f32.mxu0 0.0
        %1034 = vmatmul.mubr.f32.gmra.mxu0 %v236
        %v1035 = vpop.f32.mrf.mxu0
        %v1036 = vadd.f32 0.0, %v1035
        %v1037 = vpop.f32.mrf.mxu0
        %1038 = vmatprep.mubr.f32.mxu0 0.0
        %1039 = vmatmul.mubr.f32.gmra.mxu0 %v237
        %v1040 = vpop.f32.mrf.mxu0
        %v1041 = vadd.f32 0.0, %v1040
        %v1042 = vpop.f32.mrf.mxu0
        %1043 = vmatprep.mubr.f32.mxu0 0.0
        %1044 = vmatmul.mubr.f32.gmra.mxu0 %v238
        %v1045 = vpop.f32.mrf.mxu0
        %v1046 = vadd.f32 0.0, %v1045
        %v1047 = vpop.f32.mrf.mxu0
        %1048 = vmatprep.mubr.f32.mxu0 0.0
        %1049 = vmatmul.mubr.f32.gmra.mxu0 %v239
        %v1050 = vpop.f32.mrf.mxu0
        %v1051 = vadd.f32 0.0, %v1050
        %v1052 = vpop.f32.mrf.mxu0
        %1053 = vmatprep.mubr.f32.mxu0 0.0
        %1054 = vmatmul.mubr.f32.gmra.mxu0 %v240
        %v1055 = vpop.f32.mrf.mxu0
        %v1056 = vadd.f32 0.0, %v1055
        %v1057 = vpop.f32.mrf.mxu0
        %1058 = vmatprep.mubr.f32.mxu0 0.0
        %1059 = vmatmul.mubr.f32.gmra.mxu0 %v241
        %v1060 = vpop.f32.mrf.mxu0
        %v1061 = vadd.f32 0.0, %v1060
        %v1062 = vpop.f32.mrf.mxu0
        %1063 = vmatprep.mubr.f32.mxu0 0.0
        %1064 = vmatmul.mubr.f32.gmra.mxu0 %v242
        %v1065 = vpop.f32.mrf.mxu0
        %v1066 = vadd.f32 0.0, %v1065
        %v1067 = vpop.f32.mrf.mxu0
        %1068 = vmatprep.mubr.f32.mxu0 0.0
        %1069 = vmatmul.mubr.f32.gmra.mxu0 %v243
        %v1070 = vpop.f32.mrf.mxu0
        %v1071 = vadd.f32 0.0, %v1070
        %v1072 = vpop.f32.mrf.mxu0
        %1073 = vmatprep.mubr.f32.mxu0 0.0
        %1074 = vmatmul.mubr.f32.gmra.mxu0 %v244
        %v1075 = vpop.f32.mrf.mxu0
        %v1076 = vadd.f32 0.0, %v1075
        %v1077 = vpop.f32.mrf.mxu0
        %1078 = vmatprep.mubr.f32.mxu0 0.0
        %1079 = vmatmul.mubr.f32.gmra.mxu0 %v245
        %v1080 = vpop.f32.mrf.mxu0
        %v1081 = vadd.f32 0.0, %v1080
        %v1082 = vpop.f32.mrf.mxu0
        %1083 = vdwg.mxu0
        %1100 = vrot.lane.b32.xlu0 %v1006, 8
        %v1101 = vpop.permute.xlu0 %1100
        %1102 = vrot.lane.b32.xlu0 %v1011, 8
        %v1103 = vpop.permute.xlu0 %1102
        %1104 = vrot.lane.b32.xlu0 %v1016, 8
        %v1105 = vpop.permute.xlu0 %1104
        %1106 = vrot.lane.b32.xlu0 %v1021, 8
        %v1107 = vpop.permute.xlu0 %1106
        %1108 = vrot.lane.b32.xlu0 %v1026, 8
        %v1109 = vpop.permute.xlu0 %1108
        %1110 = vrot.lane.b32.xlu0 %v1031, 8
        %v1111 = vpop.permute.xlu0 %1110
        %1112 = vrot.lane.b32.xlu0 %v1036, 8
        %v1113 = vpop.permute.xlu0 %1112
        %1114 = vrot.lane.b32.xlu0 %v1041, 8
        %v1115 = vpop.permute.xlu0 %1114
        %1116 = vrot.lane.b32.xlu0 %v1046, 8
        %v1117 = vpop.permute.xlu0 %1116
        %1118 = vrot.lane.b32.xlu0 %v1051, 8
        %v1119 = vpop.permute.xlu0 %1118
        %1120 = vrot.lane.b32.xlu0 %v1056, 8
        %v1121 = vpop.permute.xlu0 %1120
        %1122 = vrot.lane.b32.xlu0 %v1061, 8
        %v1123 = vpop.permute.xlu0 %1122
        %1124 = vrot.lane.b32.xlu0 %v1066, 8
        %v1125 = vpop.permute.xlu0 %1124
        %1126 = vrot.lane.b32.xlu0 %v1071, 8
        %v1127 = vpop.permute.xlu0 %1126
        %1128 = vrot.lane.b32.xlu0 %v1076, 8
        %v1129 = vpop.permute.xlu0 %1128
        %1130 = vrot.lane.b32.xlu0 %v1081, 8
        %v1131 = vpop.permute.xlu0 %1130
        %v1148 = vsel %vm703, %v923, %v1101
        %v1149 = vsel %vm703, %v924, %v1103
        %v1150 = vsel %vm703, %v925, %v1105
        %v1151 = vsel %vm703, %v926, %v1107
        %v1152 = vsel %vm703, %v927, %v1109
        %v1153 = vsel %vm703, %v928, %v1111
        %v1154 = vsel %vm703, %v929, %v1113
        %v1155 = vsel %vm703, %v930, %v1115
        %v1156 = vsel %vm703, %v931, %v1117
        %v1157 = vsel %vm703, %v932, %v1119
        %v1158 = vsel %vm703, %v933, %v1121
        %v1159 = vsel %vm703, %v934, %v1123
        %v1160 = vsel %vm703, %v935, %v1125
        %v1161 = vsel %vm703, %v936, %v1127
        %v1162 = vsel %vm703, %v937, %v1129
        %v1163 = vsel %vm703, %v938, %v1131
        %s1164 = scalar_lea.vmem %s3, 160
        %v1165 = vld [vmem:[%s1164] sm:$0xff]
        %v1166 = vld [vmem:[%s1164 + $0x8] sm:$0xff]
        %s1167 = scalar_lea.vmem %s3, 192
        %v1168 = vld [vmem:[%s1167] sm:$0x1]
        %v1169 = vlaneseq
        %v1170 = vshrl.u32 %v1169, 7
        %v1171 = vsub.s32 0, %v1170
        %v1172 = vrot.slane %v1168, %v1171
        %v1174 = vsel %vm729, %v1148, 0
        %v1177 = vsel %vm729, %v1149, 0
        %v1180 = vsel %vm729, %v1150, 0
        %v1183 = vsel %vm729, %v1151, 0
        %v1186 = vsel %vm729, %v1152, 0
        %v1189 = vsel %vm729, %v1153, 0
        %v1192 = vsel %vm729, %v1154, 0
        %v1195 = vsel %vm729, %v1155, 0
        %v1198 = vsel %vm729, %v1156, 0
        %v1201 = vsel %vm729, %v1157, 0
        %v1204 = vsel %vm729, %v1158, 0
        %v1207 = vsel %vm729, %v1159, 0
        %v1210 = vsel %vm729, %v1160, 0
        %v1213 = vsel %vm729, %v1161, 0
        %v1216 = vsel %vm729, %v1162, 0
        %v1219 = vsel %vm729, %v1163, 0
        %1221 = vmatprep.subr.mxu0 0.0
        %1222 = vmatpush1.msra.mxu0 0.0
        %1223 = vmatprep.subr.mxu0 0.0
        %1224 = vmatpush1.msra.mxu0 0.0
        %1225 = vmatprep.subr.mxu0 0.0
        %1226 = vmatpush1.msra.mxu0 0.0
        %1227 = vmatprep.subr.mxu0 0.0
        %1228 = vmatpush1.msra.mxu0 0.0
        %1229 = vmatprep.subr.mxu0 0.0
        %1230 = vmatpush1.msra.mxu0 0.0
        %1231 = vmatprep.subr.mxu0 0.0
        %1232 = vmatpush1.msra.mxu0 0.0
        %1233 = vmatprep.subr.mxu0 0.0
        %1234 = vmatpush1.msra.mxu0 0.0
        %1235 = vmatprep.subr.mxu0 0.0
        %1236 = vmatpush1.msra.mxu0 0.0
        %1237 = vmatprep.subr.mxu0 0.0
        %1238 = vmatpush1.msra.mxu0 0.0
        %1239 = vmatprep.subr.mxu0 0.0
        %1240 = vmatpush1.msra.mxu0 0.0
        %1241 = vmatprep.subr.mxu0 0.0
        %1242 = vmatpush1.msra.mxu0 0.0
        %1243 = vmatprep.subr.mxu0 0.0
        %1244 = vmatpush1.msra.mxu0 0.0
        %1245 = vmatprep.subr.mxu0 0.0
        %1246 = vmatpush1.msra.mxu0 0.0
        %1247 = vmatprep.subr.mxu0 0.0
        %1248 = vmatpush1.msra.mxu0 0.0
        %1249 = vmatprep.subr.mxu0 0.0
        %1250 = vmatpush1.msra.mxu0 %v1166
        %1251 = vmatprep.subr.mxu0 0.0
        %1252 = vmatpush1.msra.mxu0 %v1165
        %1253 = vmatprep.subr.mxu0 0.0
        %1254 = vmatpush2.msra.mxu0 0.0
        %1255 = vmatprep.subr.mxu0 0.0
        %1256 = vmatpush2.msra.mxu0 0.0
        %1257 = vmatprep.subr.mxu0 0.0
        %1258 = vmatpush2.msra.mxu0 0.0
        %1259 = vmatprep.subr.mxu0 0.0
        %1260 = vmatpush2.msra.mxu0 0.0
        %1261 = vmatprep.subr.mxu0 0.0
        %1262 = vmatpush2.msra.mxu0 0.0
        %1263 = vmatprep.subr.mxu0 0.0
        %1264 = vmatpush2.msra.mxu0 0.0
        %1265 = vmatprep.subr.mxu0 0.0
        %1266 = vmatpush2.msra.mxu0 0.0
        %1267 = vmatprep.subr.mxu0 0.0
        %1268 = vmatpush2.msra.mxu0 0.0
        %1269 = vmatprep.subr.mxu0 0.0
        %1270 = vmatpush2.msra.mxu0 0.0
        %1271 = vmatprep.subr.mxu0 0.0
        %1272 = vmatpush2.msra.mxu0 0.0
        %1273 = vmatprep.subr.mxu0 0.0
        %1274 = vmatpush2.msra.mxu0 0.0
        %1275 = vmatprep.subr.mxu0 0.0
        %1276 = vmatpush2.msra.mxu0 0.0
        %1277 = vmatprep.subr.mxu0 0.0
        %1278 = vmatpush2.msra.mxu0 0.0
        %1279 = vmatprep.subr.mxu0 0.0
        %1280 = vmatpush2.msra.mxu0 0.0
        %1281 = vmatprep.subr.mxu0 0.0
        %1282 = vmatpush2.msra.mxu0 0.0
        %1283 = vmatprep.subr.mxu0 0.0
        %1284 = vmatpush2.msra.mxu0 0.0
        %1285 = vmatprep.mubr.f32.mxu0 0.0
        %1286 = vmatmul.mubr.f32.gmra.mxu0 %v1174
        %v1287 = vpop.f32.mrf.mxu0
        %v1288 = vadd.f32 %v1172, %v1287
        %v1289 = vpop.f32.mrf.mxu0
        %1290 = vmatprep.mubr.f32.mxu0 0.0
        %1291 = vmatmul.mubr.f32.gmra.mxu0 %v1177
        %v1292 = vpop.f32.mrf.mxu0
        %v1293 = vadd.f32 %v1172, %v1292
        %v1294 = vpop.f32.mrf.mxu0
        %1295 = vmatprep.mubr.f32.mxu0 0.0
        %1296 = vmatmul.mubr.f32.gmra.mxu0 %v1180
        %v1297 = vpop.f32.mrf.mxu0
        %v1298 = vadd.f32 %v1172, %v1297
        %v1299 = vpop.f32.mrf.mxu0
        %1300 = vmatprep.mubr.f32.mxu0 0.0
        %1301 = vmatmul.mubr.f32.gmra.mxu0 %v1183
        %v1302 = vpop.f32.mrf.mxu0
        %v1303 = vadd.f32 %v1172, %v1302
        %v1304 = vpop.f32.mrf.mxu0
        %1305 = vmatprep.mubr.f32.mxu0 0.0
        %1306 = vmatmul.mubr.f32.gmra.mxu0 %v1186
        %v1307 = vpop.f32.mrf.mxu0
        %v1308 = vadd.f32 %v1172, %v1307
        %v1309 = vpop.f32.mrf.mxu0
        %1310 = vmatprep.mubr.f32.mxu0 0.0
        %1311 = vmatmul.mubr.f32.gmra.mxu0 %v1189
        %v1312 = vpop.f32.mrf.mxu0
        %v1313 = vadd.f32 %v1172, %v1312
        %v1314 = vpop.f32.mrf.mxu0
        %1315 = vmatprep.mubr.f32.mxu0 0.0
        %1316 = vmatmul.mubr.f32.gmra.mxu0 %v1192
        %v1317 = vpop.f32.mrf.mxu0
        %v1318 = vadd.f32 %v1172, %v1317
        %v1319 = vpop.f32.mrf.mxu0
        %1320 = vmatprep.mubr.f32.mxu0 0.0
        %1321 = vmatmul.mubr.f32.gmra.mxu0 %v1195
        %v1322 = vpop.f32.mrf.mxu0
        %v1323 = vadd.f32 %v1172, %v1322
        %v1324 = vpop.f32.mrf.mxu0
        %1325 = vmatprep.mubr.f32.mxu0 0.0
        %1326 = vmatmul.mubr.f32.gmra.mxu0 %v1198
        %v1327 = vpop.f32.mrf.mxu0
        %v1328 = vadd.f32 %v1172, %v1327
        %v1329 = vpop.f32.mrf.mxu0
        %1330 = vmatprep.mubr.f32.mxu0 0.0
        %1331 = vmatmul.mubr.f32.gmra.mxu0 %v1201
        %v1332 = vpop.f32.mrf.mxu0
        %v1333 = vadd.f32 %v1172, %v1332
        %v1334 = vpop.f32.mrf.mxu0
        %1335 = vmatprep.mubr.f32.mxu0 0.0
        %1336 = vmatmul.mubr.f32.gmra.mxu0 %v1204
        %v1337 = vpop.f32.mrf.mxu0
        %v1338 = vadd.f32 %v1172, %v1337
        %v1339 = vpop.f32.mrf.mxu0
        %1340 = vmatprep.mubr.f32.mxu0 0.0
        %1341 = vmatmul.mubr.f32.gmra.mxu0 %v1207
        %v1342 = vpop.f32.mrf.mxu0
        %v1343 = vadd.f32 %v1172, %v1342
        %v1344 = vpop.f32.mrf.mxu0
        %1345 = vmatprep.mubr.f32.mxu0 0.0
        %1346 = vmatmul.mubr.f32.gmra.mxu0 %v1210
        %v1347 = vpop.f32.mrf.mxu0
        %v1348 = vadd.f32 %v1172, %v1347
        %v1349 = vpop.f32.mrf.mxu0
        %1350 = vmatprep.mubr.f32.mxu0 0.0
        %1351 = vmatmul.mubr.f32.gmra.mxu0 %v1213
        %v1352 = vpop.f32.mrf.mxu0
        %v1353 = vadd.f32 %v1172, %v1352
        %v1354 = vpop.f32.mrf.mxu0
        %1355 = vmatprep.mubr.f32.mxu0 0.0
        %1356 = vmatmul.mubr.f32.gmra.mxu0 %v1216
        %v1357 = vpop.f32.mrf.mxu0
        %v1358 = vadd.f32 %v1172, %v1357
        %v1359 = vpop.f32.mrf.mxu0
        %1360 = vmatprep.mubr.f32.mxu0 0.0
        %1361 = vmatmul.mubr.f32.gmra.mxu0 %v1219
        %v1362 = vpop.f32.mrf.mxu0
        %v1363 = vadd.f32 %v1172, %v1362
        %v1364 = vpop.f32.mrf.mxu0
        %1365 = vdwg.mxu0
        %v1366 = vmax.f32 %v1288, 0.0
        %v1367 = vmax.f32 %v1293, 0.0
        %v1368 = vmax.f32 %v1298, 0.0
        %v1369 = vmax.f32 %v1303, 0.0
        %v1370 = vmax.f32 %v1308, 0.0
        %v1371 = vmax.f32 %v1313, 0.0
        %v1372 = vmax.f32 %v1318, 0.0
        %v1373 = vmax.f32 %v1323, 0.0
        %v1374 = vmax.f32 %v1328, 0.0
        %v1375 = vmax.f32 %v1333, 0.0
        %v1376 = vmax.f32 %v1338, 0.0
        %v1377 = vmax.f32 %v1343, 0.0
        %v1378 = vmax.f32 %v1348, 0.0
        %v1379 = vmax.f32 %v1353, 0.0
        %v1380 = vmax.f32 %v1358, 0.0
        %v1381 = vmax.f32 %v1363, 0.0
        %1382 = vmatprep.subr.mxu0 0.0
        %1383 = vmatpush1.msra.mxu0 %v1381
        %1384 = vmatprep.subr.mxu0 0.0
        %1385 = vmatpush1.msra.mxu0 %v1380
        %1386 = vmatprep.subr.mxu0 0.0
        %1387 = vmatpush1.msra.mxu0 %v1379
        %1388 = vmatprep.subr.mxu0 0.0
        %1389 = vmatpush1.msra.mxu0 %v1378
        %1390 = vmatprep.subr.mxu0 0.0
        %1391 = vmatpush1.msra.mxu0 %v1377
        %1392 = vmatprep.subr.mxu0 0.0
        %1393 = vmatpush1.msra.mxu0 %v1376
        %1394 = vmatprep.subr.mxu0 0.0
        %1395 = vmatpush1.msra.mxu0 %v1375
        %1396 = vmatprep.subr.mxu0 0.0
        %1397 = vmatpush1.msra.mxu0 %v1374
        %1398 = vmatprep.subr.mxu0 0.0
        %1399 = vmatpush1.msra.mxu0 %v1373
        %1400 = vmatprep.subr.mxu0 0.0
        %1401 = vmatpush1.msra.mxu0 %v1372
        %1402 = vmatprep.subr.mxu0 0.0
        %1403 = vmatpush1.msra.mxu0 %v1371
        %1404 = vmatprep.subr.mxu0 0.0
        %1405 = vmatpush1.msra.mxu0 %v1370
        %1406 = vmatprep.subr.mxu0 0.0
        %1407 = vmatpush1.msra.mxu0 %v1369
        %1408 = vmatprep.subr.mxu0 0.0
        %1409 = vmatpush1.msra.mxu0 %v1368
        %1410 = vmatprep.subr.mxu0 0.0
        %1411 = vmatpush1.msra.mxu0 %v1367
        %1412 = vmatprep.subr.mxu0 0.0
        %1413 = vmatpush1.msra.mxu0 %v1366
        %1414 = vmatprep.subr.mxu0 0.0
        %1415 = vmatpush2.msra.mxu0 0.0
        %1416 = vmatprep.subr.mxu0 0.0
        %1417 = vmatpush2.msra.mxu0 0.0
        %1418 = vmatprep.subr.mxu0 0.0
        %1419 = vmatpush2.msra.mxu0 0.0
        %1420 = vmatprep.subr.mxu0 0.0
        %1421 = vmatpush2.msra.mxu0 0.0
        %1422 = vmatprep.subr.mxu0 0.0
        %1423 = vmatpush2.msra.mxu0 0.0
        %1424 = vmatprep.subr.mxu0 0.0
        %1425 = vmatpush2.msra.mxu0 0.0
        %1426 = vmatprep.subr.mxu0 0.0
        %1427 = vmatpush2.msra.mxu0 0.0
        %1428 = vmatprep.subr.mxu0 0.0
        %1429 = vmatpush2.msra.mxu0 0.0
        %1430 = vmatprep.subr.mxu0 0.0
        %1431 = vmatpush2.msra.mxu0 0.0
        %1432 = vmatprep.subr.mxu0 0.0
        %1433 = vmatpush2.msra.mxu0 0.0
        %1434 = vmatprep.subr.mxu0 0.0
        %1435 = vmatpush2.msra.mxu0 0.0
        %1436 = vmatprep.subr.mxu0 0.0
        %1437 = vmatpush2.msra.mxu0 0.0
        %1438 = vmatprep.subr.mxu0 0.0
        %1439 = vmatpush2.msra.mxu0 0.0
        %1440 = vmatprep.subr.mxu0 0.0
        %1441 = vmatpush2.msra.mxu0 0.0
        %1442 = vmatprep.subr.mxu0 0.0
        %1443 = vmatpush2.msra.mxu0 0.0
        %1444 = vmatprep.subr.mxu0 0.0
        %1445 = vmatpush2.msra.mxu0 0.0
        %1446 = vmatprep.mubr.f32.mxu0 0.0
        %1447 = vmatmul.mubr.f32.gmra.mxu0 %v230
        %v1448 = vpop.f32.mrf.mxu0
        %v1449 = vadd.f32 0.0, %v1448
        %v1450 = vpop.f32.mrf.mxu0
        %1451 = vmatprep.mubr.f32.mxu0 0.0
        %1452 = vmatmul.mubr.f32.gmra.mxu0 %v231
        %v1453 = vpop.f32.mrf.mxu0
        %v1454 = vadd.f32 0.0, %v1453
        %v1455 = vpop.f32.mrf.mxu0
        %1456 = vmatprep.mubr.f32.mxu0 0.0
        %1457 = vmatmul.mubr.f32.gmra.mxu0 %v232
        %v1458 = vpop.f32.mrf.mxu0
        %v1459 = vadd.f32 0.0, %v1458
        %v1460 = vpop.f32.mrf.mxu0
        %1461 = vmatprep.mubr.f32.mxu0 0.0
        %1462 = vmatmul.mubr.f32.gmra.mxu0 %v233
        %v1463 = vpop.f32.mrf.mxu0
        %v1464 = vadd.f32 0.0, %v1463
        %v1465 = vpop.f32.mrf.mxu0
        %1466 = vmatprep.mubr.f32.mxu0 0.0
        %1467 = vmatmul.mubr.f32.gmra.mxu0 %v234
        %v1468 = vpop.f32.mrf.mxu0
        %v1469 = vadd.f32 0.0, %v1468
        %v1470 = vpop.f32.mrf.mxu0
        %1471 = vmatprep.mubr.f32.mxu0 0.0
        %1472 = vmatmul.mubr.f32.gmra.mxu0 %v235
        %v1473 = vpop.f32.mrf.mxu0
        %v1474 = vadd.f32 0.0, %v1473
        %v1475 = vpop.f32.mrf.mxu0
        %1476 = vmatprep.mubr.f32.mxu0 0.0
        %1477 = vmatmul.mubr.f32.gmra.mxu0 %v236
        %v1478 = vpop.f32.mrf.mxu0
        %v1479 = vadd.f32 0.0, %v1478
        %v1480 = vpop.f32.mrf.mxu0
        %1481 = vmatprep.mubr.f32.mxu0 0.0
        %1482 = vmatmul.mubr.f32.gmra.mxu0 %v237
        %v1483 = vpop.f32.mrf.mxu0
        %v1484 = vadd.f32 0.0, %v1483
        %v1485 = vpop.f32.mrf.mxu0
        %1486 = vmatprep.mubr.f32.mxu0 0.0
        %1487 = vmatmul.mubr.f32.gmra.mxu0 %v238
        %v1488 = vpop.f32.mrf.mxu0
        %v1489 = vadd.f32 0.0, %v1488
        %v1490 = vpop.f32.mrf.mxu0
        %1491 = vmatprep.mubr.f32.mxu0 0.0
        %1492 = vmatmul.mubr.f32.gmra.mxu0 %v239
        %v1493 = vpop.f32.mrf.mxu0
        %v1494 = vadd.f32 0.0, %v1493
        %v1495 = vpop.f32.mrf.mxu0
        %1496 = vmatprep.mubr.f32.mxu0 0.0
        %1497 = vmatmul.mubr.f32.gmra.mxu0 %v240
        %v1498 = vpop.f32.mrf.mxu0
        %v1499 = vadd.f32 0.0, %v1498
        %v1500 = vpop.f32.mrf.mxu0
        %1501 = vmatprep.mubr.f32.mxu0 0.0
        %1502 = vmatmul.mubr.f32.gmra.mxu0 %v241
        %v1503 = vpop.f32.mrf.mxu0
        %v1504 = vadd.f32 0.0, %v1503
        %v1505 = vpop.f32.mrf.mxu0
        %1506 = vmatprep.mubr.f32.mxu0 0.0
        %1507 = vmatmul.mubr.f32.gmra.mxu0 %v242
        %v1508 = vpop.f32.mrf.mxu0
        %v1509 = vadd.f32 0.0, %v1508
        %v1510 = vpop.f32.mrf.mxu0
        %1511 = vmatprep.mubr.f32.mxu0 0.0
        %1512 = vmatmul.mubr.f32.gmra.mxu0 %v243
        %v1513 = vpop.f32.mrf.mxu0
        %v1514 = vadd.f32 0.0, %v1513
        %v1515 = vpop.f32.mrf.mxu0
        %1516 = vmatprep.mubr.f32.mxu0 0.0
        %1517 = vmatmul.mubr.f32.gmra.mxu0 %v244
        %v1518 = vpop.f32.mrf.mxu0
        %v1519 = vadd.f32 0.0, %v1518
        %v1520 = vpop.f32.mrf.mxu0
        %1521 = vmatprep.mubr.f32.mxu0 0.0
        %1522 = vmatmul.mubr.f32.gmra.mxu0 %v245
        %v1523 = vpop.f32.mrf.mxu0
        %v1524 = vadd.f32 0.0, %v1523
        %v1525 = vpop.f32.mrf.mxu0
        %1526 = vdwg.mxu0
        %1543 = vrot.lane.b32.xlu0 %v1449, 16
        %v1544 = vpop.permute.xlu0 %1543
        %1545 = vrot.lane.b32.xlu0 %v1454, 16
        %v1546 = vpop.permute.xlu0 %1545
        %1547 = vrot.lane.b32.xlu0 %v1459, 16
        %v1548 = vpop.permute.xlu0 %1547
        %1549 = vrot.lane.b32.xlu0 %v1464, 16
        %v1550 = vpop.permute.xlu0 %1549
        %1551 = vrot.lane.b32.xlu0 %v1469, 16
        %v1552 = vpop.permute.xlu0 %1551
        %1553 = vrot.lane.b32.xlu0 %v1474, 16
        %v1554 = vpop.permute.xlu0 %1553
        %1555 = vrot.lane.b32.xlu0 %v1479, 16
        %v1556 = vpop.permute.xlu0 %1555
        %1557 = vrot.lane.b32.xlu0 %v1484, 16
        %v1558 = vpop.permute.xlu0 %1557
        %1559 = vrot.lane.b32.xlu0 %v1489, 16
        %v1560 = vpop.permute.xlu0 %1559
        %1561 = vrot.lane.b32.xlu0 %v1494, 16
        %v1562 = vpop.permute.xlu0 %1561
        %1563 = vrot.lane.b32.xlu0 %v1499, 16
        %v1564 = vpop.permute.xlu0 %1563
        %1565 = vrot.lane.b32.xlu0 %v1504, 16
        %v1566 = vpop.permute.xlu0 %1565
        %1567 = vrot.lane.b32.xlu0 %v1509, 16
        %v1568 = vpop.permute.xlu0 %1567
        %1569 = vrot.lane.b32.xlu0 %v1514, 16
        %v1570 = vpop.permute.xlu0 %1569
        %1571 = vrot.lane.b32.xlu0 %v1519, 16
        %v1572 = vpop.permute.xlu0 %1571
        %1573 = vrot.lane.b32.xlu0 %v1524, 16
        %v1574 = vpop.permute.xlu0 %1573
        %v1591 = vsel %vm729, %v1366, %v1544
        %v1592 = vsel %vm729, %v1367, %v1546
        %v1593 = vsel %vm729, %v1368, %v1548
        %v1594 = vsel %vm729, %v1369, %v1550
        %v1595 = vsel %vm729, %v1370, %v1552
        %v1596 = vsel %vm729, %v1371, %v1554
        %v1597 = vsel %vm729, %v1372, %v1556
        %v1598 = vsel %vm729, %v1373, %v1558
        %v1599 = vsel %vm729, %v1374, %v1560
        %v1600 = vsel %vm729, %v1375, %v1562
        %v1601 = vsel %vm729, %v1376, %v1564
        %v1602 = vsel %vm729, %v1377, %v1566
        %v1603 = vsel %vm729, %v1378, %v1568
        %v1604 = vsel %vm729, %v1379, %v1570
        %v1605 = vsel %vm729, %v1380, %v1572
        %v1606 = vsel %vm729, %v1381, %v1574
        %s1607 = scalar_lea.vmem %s3, 224
        %v1608 = vld [vmem:[%s1607] sm:$0xff]
        %v1609 = vld [vmem:[%s1607 + $0x8] sm:$0xff]
        %v1610 = vld [vmem:[%s1607 + $0x10] sm:$0xff]
        %v1611 = vld [vmem:[%s1607 + $0x18] sm:$0xff]
        %s1612 = scalar_lea.vmem %s3, 256
        %v1613 = vld [vmem:[%s1612] sm:$0x1]
        %v1614 = vlaneseq
        %v1615 = vshrl.u32 %v1614, 7
        %v1616 = vsub.s32 0, %v1615
        %v1617 = vrot.slane %v1613, %v1616
        %vm1618 = vcmask 261120
        %v1620 = vsel %vm1618, %v1591, 0
        %v1623 = vsel %vm1618, %v1592, 0
        %v1626 = vsel %vm1618, %v1593, 0
        %v1629 = vsel %vm1618, %v1594, 0
        %v1632 = vsel %vm1618, %v1595, 0
        %v1635 = vsel %vm1618, %v1596, 0
        %v1638 = vsel %vm1618, %v1597, 0
        %v1641 = vsel %vm1618, %v1598, 0
        %v1644 = vsel %vm1618, %v1599, 0
        %v1647 = vsel %vm1618, %v1600, 0
        %v1650 = vsel %vm1618, %v1601, 0
        %v1653 = vsel %vm1618, %v1602, 0
        %v1656 = vsel %vm1618, %v1603, 0
        %v1659 = vsel %vm1618, %v1604, 0
        %v1662 = vsel %vm1618, %v1605, 0
        %v1665 = vsel %vm1618, %v1606, 0
        %1667 = vmatprep.subr.mxu0 0.0
        %1668 = vmatpush1.msra.mxu0 0.0
        %1669 = vmatprep.subr.mxu0 0.0
        %1670 = vmatpush1.msra.mxu0 0.0
        %1671 = vmatprep.subr.mxu0 0.0
        %1672 = vmatpush1.msra.mxu0 0.0
        %1673 = vmatprep.subr.mxu0 0.0
        %1674 = vmatpush1.msra.mxu0 0.0
        %1675 = vmatprep.subr.mxu0 0.0
        %1676 = vmatpush1.msra.mxu0 0.0
        %1677 = vmatprep.subr.mxu0 0.0
        %1678 = vmatpush1.msra.mxu0 0.0
        %1679 = vmatprep.subr.mxu0 0.0
        %1680 = vmatpush1.msra.mxu0 0.0
        %1681 = vmatprep.subr.mxu0 0.0
        %1682 = vmatpush1.msra.mxu0 0.0
        %1683 = vmatprep.subr.mxu0 0.0
        %1684 = vmatpush1.msra.mxu0 0.0
        %1685 = vmatprep.subr.mxu0 0.0
        %1686 = vmatpush1.msra.mxu0 0.0
        %1687 = vmatprep.subr.mxu0 0.0
        %1688 = vmatpush1.msra.mxu0 0.0
        %1689 = vmatprep.subr.mxu0 0.0
        %1690 = vmatpush1.msra.mxu0 0.0
        %1691 = vmatprep.subr.mxu0 0.0
        %1692 = vmatpush1.msra.mxu0 %v1611
        %1693 = vmatprep.subr.mxu0 0.0
        %1694 = vmatpush1.msra.mxu0 %v1610
        %1695 = vmatprep.subr.mxu0 0.0
        %1696 = vmatpush1.msra.mxu0 %v1609
        %1697 = vmatprep.subr.mxu0 0.0
        %1698 = vmatpush1.msra.mxu0 %v1608
        %1699 = vmatprep.subr.mxu0 0.0
        %1700 = vmatpush2.msra.mxu0 0.0
        %1701 = vmatprep.subr.mxu0 0.0
        %1702 = vmatpush2.msra.mxu0 0.0
        %1703 = vmatprep.subr.mxu0 0.0
        %1704 = vmatpush2.msra.mxu0 0.0
        %1705 = vmatprep.subr.mxu0 0.0
        %1706 = vmatpush2.msra.mxu0 0.0
        %1707 = vmatprep.subr.mxu0 0.0
        %1708 = vmatpush2.msra.mxu0 0.0
        %1709 = vmatprep.subr.mxu0 0.0
        %1710 = vmatpush2.msra.mxu0 0.0
        %1711 = vmatprep.subr.mxu0 0.0
        %1712 = vmatpush2.msra.mxu0 0.0
        %1713 = vmatprep.subr.mxu0 0.0
        %1714 = vmatpush2.msra.mxu0 0.0
        %1715 = vmatprep.subr.mxu0 0.0
        %1716 = vmatpush2.msra.mxu0 0.0
        %1717 = vmatprep.subr.mxu0 0.0
        %1718 = vmatpush2.msra.mxu0 0.0
        %1719 = vmatprep.subr.mxu0 0.0
        %1720 = vmatpush2.msra.mxu0 0.0
        %1721 = vmatprep.subr.mxu0 0.0
        %1722 = vmatpush2.msra.mxu0 0.0
        %1723 = vmatprep.subr.mxu0 0.0
        %1724 = vmatpush2.msra.mxu0 0.0
        %1725 = vmatprep.subr.mxu0 0.0
        %1726 = vmatpush2.msra.mxu0 0.0
        %1727 = vmatprep.subr.mxu0 0.0
        %1728 = vmatpush2.msra.mxu0 0.0
        %1729 = vmatprep.subr.mxu0 0.0
        %1730 = vmatpush2.msra.mxu0 0.0
        %1731 = vmatprep.mubr.f32.mxu0 0.0
        %1732 = vmatmul.mubr.f32.gmra.mxu0 %v1620
        %v1733 = vpop.f32.mrf.mxu0
        %v1734 = vadd.f32 %v1617, %v1733
        %v1735 = vpop.f32.mrf.mxu0
        %1736 = vmatprep.mubr.f32.mxu0 0.0
        %1737 = vmatmul.mubr.f32.gmra.mxu0 %v1623
        %v1738 = vpop.f32.mrf.mxu0
        %v1739 = vadd.f32 %v1617, %v1738
        %v1740 = vpop.f32.mrf.mxu0
        %1741 = vmatprep.mubr.f32.mxu0 0.0
        %1742 = vmatmul.mubr.f32.gmra.mxu0 %v1626
        %v1743 = vpop.f32.mrf.mxu0
        %v1744 = vadd.f32 %v1617, %v1743
        %v1745 = vpop.f32.mrf.mxu0
        %1746 = vmatprep.mubr.f32.mxu0 0.0
        %1747 = vmatmul.mubr.f32.gmra.mxu0 %v1629
        %v1748 = vpop.f32.mrf.mxu0
        %v1749 = vadd.f32 %v1617, %v1748
        %v1750 = vpop.f32.mrf.mxu0
        %1751 = vmatprep.mubr.f32.mxu0 0.0
        %1752 = vmatmul.mubr.f32.gmra.mxu0 %v1632
        %v1753 = vpop.f32.mrf.mxu0
        %v1754 = vadd.f32 %v1617, %v1753
        %v1755 = vpop.f32.mrf.mxu0
        %1756 = vmatprep.mubr.f32.mxu0 0.0
        %1757 = vmatmul.mubr.f32.gmra.mxu0 %v1635
        %v1758 = vpop.f32.mrf.mxu0
        %v1759 = vadd.f32 %v1617, %v1758
        %v1760 = vpop.f32.mrf.mxu0
        %1761 = vmatprep.mubr.f32.mxu0 0.0
        %1762 = vmatmul.mubr.f32.gmra.mxu0 %v1638
        %v1763 = vpop.f32.mrf.mxu0
        %v1764 = vadd.f32 %v1617, %v1763
        %v1765 = vpop.f32.mrf.mxu0
        %1766 = vmatprep.mubr.f32.mxu0 0.0
        %1767 = vmatmul.mubr.f32.gmra.mxu0 %v1641
        %v1768 = vpop.f32.mrf.mxu0
        %v1769 = vadd.f32 %v1617, %v1768
        %v1770 = vpop.f32.mrf.mxu0
        %1771 = vmatprep.mubr.f32.mxu0 0.0
        %1772 = vmatmul.mubr.f32.gmra.mxu0 %v1644
        %v1773 = vpop.f32.mrf.mxu0
        %v1774 = vadd.f32 %v1617, %v1773
        %v1775 = vpop.f32.mrf.mxu0
        %1776 = vmatprep.mubr.f32.mxu0 0.0
        %1777 = vmatmul.mubr.f32.gmra.mxu0 %v1647
        %v1778 = vpop.f32.mrf.mxu0
        %v1779 = vadd.f32 %v1617, %v1778
        %v1780 = vpop.f32.mrf.mxu0
        %1781 = vmatprep.mubr.f32.mxu0 0.0
        %1782 = vmatmul.mubr.f32.gmra.mxu0 %v1650
        %v1783 = vpop.f32.mrf.mxu0
        %v1784 = vadd.f32 %v1617, %v1783
        %v1785 = vpop.f32.mrf.mxu0
        %1786 = vmatprep.mubr.f32.mxu0 0.0
        %1787 = vmatmul.mubr.f32.gmra.mxu0 %v1653
        %v1788 = vpop.f32.mrf.mxu0
        %v1789 = vadd.f32 %v1617, %v1788
        %v1790 = vpop.f32.mrf.mxu0
        %1791 = vmatprep.mubr.f32.mxu0 0.0
        %1792 = vmatmul.mubr.f32.gmra.mxu0 %v1656
        %v1793 = vpop.f32.mrf.mxu0
        %v1794 = vadd.f32 %v1617, %v1793
        %v1795 = vpop.f32.mrf.mxu0
        %1796 = vmatprep.mubr.f32.mxu0 0.0
        %1797 = vmatmul.mubr.f32.gmra.mxu0 %v1659
        %v1798 = vpop.f32.mrf.mxu0
        %v1799 = vadd.f32 %v1617, %v1798
        %v1800 = vpop.f32.mrf.mxu0
        %1801 = vmatprep.mubr.f32.mxu0 0.0
        %1802 = vmatmul.mubr.f32.gmra.mxu0 %v1662
        %v1803 = vpop.f32.mrf.mxu0
        %v1804 = vadd.f32 %v1617, %v1803
        %v1805 = vpop.f32.mrf.mxu0
        %1806 = vmatprep.mubr.f32.mxu0 0.0
        %1807 = vmatmul.mubr.f32.gmra.mxu0 %v1665
        %v1808 = vpop.f32.mrf.mxu0
        %v1809 = vadd.f32 %v1617, %v1808
        %v1810 = vpop.f32.mrf.mxu0
        %1811 = vdwg.mxu0
        %v1812 = vmax.f32 %v1734, 0.0
        %v1813 = vmax.f32 %v1739, 0.0
        %v1814 = vmax.f32 %v1744, 0.0
        %v1815 = vmax.f32 %v1749, 0.0
        %v1816 = vmax.f32 %v1754, 0.0
        %v1817 = vmax.f32 %v1759, 0.0
        %v1818 = vmax.f32 %v1764, 0.0
        %v1819 = vmax.f32 %v1769, 0.0
        %v1820 = vmax.f32 %v1774, 0.0
        %v1821 = vmax.f32 %v1779, 0.0
        %v1822 = vmax.f32 %v1784, 0.0
        %v1823 = vmax.f32 %v1789, 0.0
        %v1824 = vmax.f32 %v1794, 0.0
        %v1825 = vmax.f32 %v1799, 0.0
        %v1826 = vmax.f32 %v1804, 0.0
        %v1827 = vmax.f32 %v1809, 0.0
        %s1828 = scalar_lea.vmem %s3, 288
        %v1829 = vld [vmem:[%s1828] sm:$0xff]
        %v1830 = vld [vmem:[%s1828 + $0x8] sm:$0xff]
        %s1831 = scalar_lea.vmem %s3, 320
        %v1832 = vld [vmem:[%s1831] sm:$0x1]
        %v1833 = vlaneseq
        %v1834 = vshrl.u32 %v1833, 7
        %v1835 = vsub.s32 0, %v1834
        %v1836 = vrot.slane %v1832, %v1835
        %v1838 = vsel %vm729, %v1812, 0
        %v1841 = vsel %vm729, %v1813, 0
        %v1844 = vsel %vm729, %v1814, 0
        %v1847 = vsel %vm729, %v1815, 0
        %v1850 = vsel %vm729, %v1816, 0
        %v1853 = vsel %vm729, %v1817, 0
        %v1856 = vsel %vm729, %v1818, 0
        %v1859 = vsel %vm729, %v1819, 0
        %v1862 = vsel %vm729, %v1820, 0
        %v1865 = vsel %vm729, %v1821, 0
        %v1868 = vsel %vm729, %v1822, 0
        %v1871 = vsel %vm729, %v1823, 0
        %v1874 = vsel %vm729, %v1824, 0
        %v1877 = vsel %vm729, %v1825, 0
        %v1880 = vsel %vm729, %v1826, 0
        %v1883 = vsel %vm729, %v1827, 0
        %1885 = vmatprep.subr.mxu0 0.0
        %1886 = vmatpush1.msra.mxu0 0.0
        %1887 = vmatprep.subr.mxu0 0.0
        %1888 = vmatpush1.msra.mxu0 0.0
        %1889 = vmatprep.subr.mxu0 0.0
        %1890 = vmatpush1.msra.mxu0 0.0
        %1891 = vmatprep.subr.mxu0 0.0
        %1892 = vmatpush1.msra.mxu0 0.0
        %1893 = vmatprep.subr.mxu0 0.0
        %1894 = vmatpush1.msra.mxu0 0.0
        %1895 = vmatprep.subr.mxu0 0.0
        %1896 = vmatpush1.msra.mxu0 0.0
        %1897 = vmatprep.subr.mxu0 0.0
        %1898 = vmatpush1.msra.mxu0 0.0
        %1899 = vmatprep.subr.mxu0 0.0
        %1900 = vmatpush1.msra.mxu0 0.0
        %1901 = vmatprep.subr.mxu0 0.0
        %1902 = vmatpush1.msra.mxu0 0.0
        %1903 = vmatprep.subr.mxu0 0.0
        %1904 = vmatpush1.msra.mxu0 0.0
        %1905 = vmatprep.subr.mxu0 0.0
        %1906 = vmatpush1.msra.mxu0 0.0
        %1907 = vmatprep.subr.mxu0 0.0
        %1908 = vmatpush1.msra.mxu0 0.0
        %1909 = vmatprep.subr.mxu0 0.0
        %1910 = vmatpush1.msra.mxu0 0.0
        %1911 = vmatprep.subr.mxu0 0.0
        %1912 = vmatpush1.msra.mxu0 0.0
        %1913 = vmatprep.subr.mxu0 0.0
        %1914 = vmatpush1.msra.mxu0 %v1830
        %1915 = vmatprep.subr.mxu0 0.0
        %1916 = vmatpush1.msra.mxu0 %v1829
        %1917 = vmatprep.subr.mxu0 0.0
        %1918 = vmatpush2.msra.mxu0 0.0
        %1919 = vmatprep.subr.mxu0 0.0
        %1920 = vmatpush2.msra.mxu0 0.0
        %1921 = vmatprep.subr.mxu0 0.0
        %1922 = vmatpush2.msra.mxu0 0.0
        %1923 = vmatprep.subr.mxu0 0.0
        %1924 = vmatpush2.msra.mxu0 0.0
        %1925 = vmatprep.subr.mxu0 0.0
        %1926 = vmatpush2.msra.mxu0 0.0
        %1927 = vmatprep.subr.mxu0 0.0
        %1928 = vmatpush2.msra.mxu0 0.0
        %1929 = vmatprep.subr.mxu0 0.0
        %1930 = vmatpush2.msra.mxu0 0.0
        %1931 = vmatprep.subr.mxu0 0.0
        %1932 = vmatpush2.msra.mxu0 0.0
        %1933 = vmatprep.subr.mxu0 0.0
        %1934 = vmatpush2.msra.mxu0 0.0
        %1935 = vmatprep.subr.mxu0 0.0
        %1936 = vmatpush2.msra.mxu0 0.0
        %1937 = vmatprep.subr.mxu0 0.0
        %1938 = vmatpush2.msra.mxu0 0.0
        %1939 = vmatprep.subr.mxu0 0.0
        %1940 = vmatpush2.msra.mxu0 0.0
        %1941 = vmatprep.subr.mxu0 0.0
        %1942 = vmatpush2.msra.mxu0 0.0
        %1943 = vmatprep.subr.mxu0 0.0
        %1944 = vmatpush2.msra.mxu0 0.0
        %1945 = vmatprep.subr.mxu0 0.0
        %1946 = vmatpush2.msra.mxu0 0.0
        %1947 = vmatprep.subr.mxu0 0.0
        %1948 = vmatpush2.msra.mxu0 0.0
        %1949 = vmatprep.mubr.f32.mxu0 0.0
        %1950 = vmatmul.mubr.f32.gmra.mxu0 %v1838
        %v1951 = vpop.f32.mrf.mxu0
        %v1952 = vadd.f32 %v1836, %v1951
        %v1953 = vpop.f32.mrf.mxu0
        %1954 = vmatprep.mubr.f32.mxu0 0.0
        %1955 = vmatmul.mubr.f32.gmra.mxu0 %v1841
        %v1956 = vpop.f32.mrf.mxu0
        %v1957 = vadd.f32 %v1836, %v1956
        %v1958 = vpop.f32.mrf.mxu0
        %1959 = vmatprep.mubr.f32.mxu0 0.0
        %1960 = vmatmul.mubr.f32.gmra.mxu0 %v1844
        %v1961 = vpop.f32.mrf.mxu0
        %v1962 = vadd.f32 %v1836, %v1961
        %v1963 = vpop.f32.mrf.mxu0
        %1964 = vmatprep.mubr.f32.mxu0 0.0
        %1965 = vmatmul.mubr.f32.gmra.mxu0 %v1847
        %v1966 = vpop.f32.mrf.mxu0
        %v1967 = vadd.f32 %v1836, %v1966
        %v1968 = vpop.f32.mrf.mxu0
        %1969 = vmatprep.mubr.f32.mxu0 0.0
        %1970 = vmatmul.mubr.f32.gmra.mxu0 %v1850
        %v1971 = vpop.f32.mrf.mxu0
        %v1972 = vadd.f32 %v1836, %v1971
        %v1973 = vpop.f32.mrf.mxu0
        %1974 = vmatprep.mubr.f32.mxu0 0.0
        %1975 = vmatmul.mubr.f32.gmra.mxu0 %v1853
        %v1976 = vpop.f32.mrf.mxu0
        %v1977 = vadd.f32 %v1836, %v1976
        %v1978 = vpop.f32.mrf.mxu0
        %1979 = vmatprep.mubr.f32.mxu0 0.0
        %1980 = vmatmul.mubr.f32.gmra.mxu0 %v1856
        %v1981 = vpop.f32.mrf.mxu0
        %v1982 = vadd.f32 %v1836, %v1981
        %v1983 = vpop.f32.mrf.mxu0
        %1984 = vmatprep.mubr.f32.mxu0 0.0
        %1985 = vmatmul.mubr.f32.gmra.mxu0 %v1859
        %v1986 = vpop.f32.mrf.mxu0
        %v1987 = vadd.f32 %v1836, %v1986
        %v1988 = vpop.f32.mrf.mxu0
        %1989 = vmatprep.mubr.f32.mxu0 0.0
        %1990 = vmatmul.mubr.f32.gmra.mxu0 %v1862
        %v1991 = vpop.f32.mrf.mxu0
        %v1992 = vadd.f32 %v1836, %v1991
        %v1993 = vpop.f32.mrf.mxu0
        %1994 = vmatprep.mubr.f32.mxu0 0.0
        %1995 = vmatmul.mubr.f32.gmra.mxu0 %v1865
        %v1996 = vpop.f32.mrf.mxu0
        %v1997 = vadd.f32 %v1836, %v1996
        %v1998 = vpop.f32.mrf.mxu0
        %1999 = vmatprep.mubr.f32.mxu0 0.0
        %2000 = vmatmul.mubr.f32.gmra.mxu0 %v1868
        %v2001 = vpop.f32.mrf.mxu0
        %v2002 = vadd.f32 %v1836, %v2001
        %v2003 = vpop.f32.mrf.mxu0
        %2004 = vmatprep.mubr.f32.mxu0 0.0
        %2005 = vmatmul.mubr.f32.gmra.mxu0 %v1871
        %v2006 = vpop.f32.mrf.mxu0
        %v2007 = vadd.f32 %v1836, %v2006
        %v2008 = vpop.f32.mrf.mxu0
        %2009 = vmatprep.mubr.f32.mxu0 0.0
        %2010 = vmatmul.mubr.f32.gmra.mxu0 %v1874
        %v2011 = vpop.f32.mrf.mxu0
        %v2012 = vadd.f32 %v1836, %v2011
        %v2013 = vpop.f32.mrf.mxu0
        %2014 = vmatprep.mubr.f32.mxu0 0.0
        %2015 = vmatmul.mubr.f32.gmra.mxu0 %v1877
        %v2016 = vpop.f32.mrf.mxu0
        %v2017 = vadd.f32 %v1836, %v2016
        %v2018 = vpop.f32.mrf.mxu0
        %2019 = vmatprep.mubr.f32.mxu0 0.0
        %2020 = vmatmul.mubr.f32.gmra.mxu0 %v1880
        %v2021 = vpop.f32.mrf.mxu0
        %v2022 = vadd.f32 %v1836, %v2021
        %v2023 = vpop.f32.mrf.mxu0
        %2024 = vmatprep.mubr.f32.mxu0 0.0
        %2025 = vmatmul.mubr.f32.gmra.mxu0 %v1883
        %v2026 = vpop.f32.mrf.mxu0
        %v2027 = vadd.f32 %v1836, %v2026
        %v2028 = vpop.f32.mrf.mxu0
        %2029 = vdwg.mxu0
        %v2030 = vmax.f32 %v1952, 0.0
        %v2031 = vmax.f32 %v1957, 0.0
        %v2032 = vmax.f32 %v1962, 0.0
        %v2033 = vmax.f32 %v1967, 0.0
        %v2034 = vmax.f32 %v1972, 0.0
        %v2035 = vmax.f32 %v1977, 0.0
        %v2036 = vmax.f32 %v1982, 0.0
        %v2037 = vmax.f32 %v1987, 0.0
        %v2038 = vmax.f32 %v1992, 0.0
        %v2039 = vmax.f32 %v1997, 0.0
        %v2040 = vmax.f32 %v2002, 0.0
        %v2041 = vmax.f32 %v2007, 0.0
        %v2042 = vmax.f32 %v2012, 0.0
        %v2043 = vmax.f32 %v2017, 0.0
        %v2044 = vmax.f32 %v2022, 0.0
        %v2045 = vmax.f32 %v2027, 0.0
        %s2046 = scalar_lea.vmem %s3, 352
        %v2047 = vld [vmem:[%s2046] sm:$0xff]
        %v2048 = vld [vmem:[%s2046 + $0x8] sm:$0xff]
        %v2049 = vld [vmem:[%s2046 + $0x10] sm:$0xff]
        %v2050 = vld [vmem:[%s2046 + $0x18] sm:$0xff]
        %s2051 = scalar_lea.vmem %s3, 384
        %v2052 = vld [vmem:[%s2051] sm:$0x1]
        %v2053 = vlaneseq
        %v2054 = vshrl.u32 %v2053, 7
        %v2055 = vsub.s32 0, %v2054
        %v2056 = vrot.slane %v2052, %v2055
        %v2058 = vsel %vm1618, %v2030, 0
        %v2061 = vsel %vm1618, %v2031, 0
        %v2064 = vsel %vm1618, %v2032, 0
        %v2067 = vsel %vm1618, %v2033, 0
        %v2070 = vsel %vm1618, %v2034, 0
        %v2073 = vsel %vm1618, %v2035, 0
        %v2076 = vsel %vm1618, %v2036, 0
        %v2079 = vsel %vm1618, %v2037, 0
        %v2082 = vsel %vm1618, %v2038, 0
        %v2085 = vsel %vm1618, %v2039, 0
        %v2088 = vsel %vm1618, %v2040, 0
        %v2091 = vsel %vm1618, %v2041, 0
        %v2094 = vsel %vm1618, %v2042, 0
        %v2097 = vsel %vm1618, %v2043, 0
        %v2100 = vsel %vm1618, %v2044, 0
        %v2103 = vsel %vm1618, %v2045, 0
        %2105 = vmatprep.subr.mxu0 0.0
        %2106 = vmatpush1.msra.mxu0 0.0
        %2107 = vmatprep.subr.mxu0 0.0
        %2108 = vmatpush1.msra.mxu0 0.0
        %2109 = vmatprep.subr.mxu0 0.0
        %2110 = vmatpush1.msra.mxu0 0.0
        %2111 = vmatprep.subr.mxu0 0.0
        %2112 = vmatpush1.msra.mxu0 0.0
        %2113 = vmatprep.subr.mxu0 0.0
        %2114 = vmatpush1.msra.mxu0 0.0
        %2115 = vmatprep.subr.mxu0 0.0
        %2116 = vmatpush1.msra.mxu0 0.0
        %2117 = vmatprep.subr.mxu0 0.0
        %2118 = vmatpush1.msra.mxu0 0.0
        %2119 = vmatprep.subr.mxu0 0.0
        %2120 = vmatpush1.msra.mxu0 0.0
        %2121 = vmatprep.subr.mxu0 0.0
        %2122 = vmatpush1.msra.mxu0 0.0
        %2123 = vmatprep.subr.mxu0 0.0
        %2124 = vmatpush1.msra.mxu0 0.0
        %2125 = vmatprep.subr.mxu0 0.0
        %2126 = vmatpush1.msra.mxu0 0.0
        %2127 = vmatprep.subr.mxu0 0.0
        %2128 = vmatpush1.msra.mxu0 0.0
        %2129 = vmatprep.subr.mxu0 0.0
        %2130 = vmatpush1.msra.mxu0 %v2050
        %2131 = vmatprep.subr.mxu0 0.0
        %2132 = vmatpush1.msra.mxu0 %v2049
        %2133 = vmatprep.subr.mxu0 0.0
        %2134 = vmatpush1.msra.mxu0 %v2048
        %2135 = vmatprep.subr.mxu0 0.0
        %2136 = vmatpush1.msra.mxu0 %v2047
        %2137 = vmatprep.subr.mxu0 0.0
        %2138 = vmatpush2.msra.mxu0 0.0
        %2139 = vmatprep.subr.mxu0 0.0
        %2140 = vmatpush2.msra.mxu0 0.0
        %2141 = vmatprep.subr.mxu0 0.0
        %2142 = vmatpush2.msra.mxu0 0.0
        %2143 = vmatprep.subr.mxu0 0.0
        %2144 = vmatpush2.msra.mxu0 0.0
        %2145 = vmatprep.subr.mxu0 0.0
        %2146 = vmatpush2.msra.mxu0 0.0
        %2147 = vmatprep.subr.mxu0 0.0
        %2148 = vmatpush2.msra.mxu0 0.0
        %2149 = vmatprep.subr.mxu0 0.0
        %2150 = vmatpush2.msra.mxu0 0.0
        %2151 = vmatprep.subr.mxu0 0.0
        %2152 = vmatpush2.msra.mxu0 0.0
        %2153 = vmatprep.subr.mxu0 0.0
        %2154 = vmatpush2.msra.mxu0 0.0
        %2155 = vmatprep.subr.mxu0 0.0
        %2156 = vmatpush2.msra.mxu0 0.0
        %2157 = vmatprep.subr.mxu0 0.0
        %2158 = vmatpush2.msra.mxu0 0.0
        %2159 = vmatprep.subr.mxu0 0.0
        %2160 = vmatpush2.msra.mxu0 0.0
        %2161 = vmatprep.subr.mxu0 0.0
        %2162 = vmatpush2.msra.mxu0 0.0
        %2163 = vmatprep.subr.mxu0 0.0
        %2164 = vmatpush2.msra.mxu0 0.0
        %2165 = vmatprep.subr.mxu0 0.0
        %2166 = vmatpush2.msra.mxu0 0.0
        %2167 = vmatprep.subr.mxu0 0.0
        %2168 = vmatpush2.msra.mxu0 0.0
        %2169 = vmatprep.mubr.f32.mxu0 0.0
        %2170 = vmatmul.mubr.f32.gmra.mxu0 %v2058
        %v2171 = vpop.f32.mrf.mxu0
        %v2172 = vadd.f32 %v2056, %v2171
        %v2173 = vpop.f32.mrf.mxu0
        %2174 = vmatprep.mubr.f32.mxu0 0.0
        %2175 = vmatmul.mubr.f32.gmra.mxu0 %v2061
        %v2176 = vpop.f32.mrf.mxu0
        %v2177 = vadd.f32 %v2056, %v2176
        %v2178 = vpop.f32.mrf.mxu0
        %2179 = vmatprep.mubr.f32.mxu0 0.0
        %2180 = vmatmul.mubr.f32.gmra.mxu0 %v2064
        %v2181 = vpop.f32.mrf.mxu0
        %v2182 = vadd.f32 %v2056, %v2181
        %v2183 = vpop.f32.mrf.mxu0
        %2184 = vmatprep.mubr.f32.mxu0 0.0
        %2185 = vmatmul.mubr.f32.gmra.mxu0 %v2067
        %v2186 = vpop.f32.mrf.mxu0
        %v2187 = vadd.f32 %v2056, %v2186
        %v2188 = vpop.f32.mrf.mxu0
        %2189 = vmatprep.mubr.f32.mxu0 0.0
        %2190 = vmatmul.mubr.f32.gmra.mxu0 %v2070
        %v2191 = vpop.f32.mrf.mxu0
        %v2192 = vadd.f32 %v2056, %v2191
        %v2193 = vpop.f32.mrf.mxu0
        %2194 = vmatprep.mubr.f32.mxu0 0.0
        %2195 = vmatmul.mubr.f32.gmra.mxu0 %v2073
        %v2196 = vpop.f32.mrf.mxu0
        %v2197 = vadd.f32 %v2056, %v2196
        %v2198 = vpop.f32.mrf.mxu0
        %2199 = vmatprep.mubr.f32.mxu0 0.0
        %2200 = vmatmul.mubr.f32.gmra.mxu0 %v2076
        %v2201 = vpop.f32.mrf.mxu0
        %v2202 = vadd.f32 %v2056, %v2201
        %v2203 = vpop.f32.mrf.mxu0
        %2204 = vmatprep.mubr.f32.mxu0 0.0
        %2205 = vmatmul.mubr.f32.gmra.mxu0 %v2079
        %v2206 = vpop.f32.mrf.mxu0
        %v2207 = vadd.f32 %v2056, %v2206
        %v2208 = vpop.f32.mrf.mxu0
        %2209 = vmatprep.mubr.f32.mxu0 0.0
        %2210 = vmatmul.mubr.f32.gmra.mxu0 %v2082
        %v2211 = vpop.f32.mrf.mxu0
        %v2212 = vadd.f32 %v2056, %v2211
        %v2213 = vpop.f32.mrf.mxu0
        %2214 = vmatprep.mubr.f32.mxu0 0.0
        %2215 = vmatmul.mubr.f32.gmra.mxu0 %v2085
        %v2216 = vpop.f32.mrf.mxu0
        %v2217 = vadd.f32 %v2056, %v2216
        %v2218 = vpop.f32.mrf.mxu0
        %2219 = vmatprep.mubr.f32.mxu0 0.0
        %2220 = vmatmul.mubr.f32.gmra.mxu0 %v2088
        %v2221 = vpop.f32.mrf.mxu0
        %v2222 = vadd.f32 %v2056, %v2221
        %v2223 = vpop.f32.mrf.mxu0
        %2224 = vmatprep.mubr.f32.mxu0 0.0
        %2225 = vmatmul.mubr.f32.gmra.mxu0 %v2091
        %v2226 = vpop.f32.mrf.mxu0
        %v2227 = vadd.f32 %v2056, %v2226
        %v2228 = vpop.f32.mrf.mxu0
        %2229 = vmatprep.mubr.f32.mxu0 0.0
        %2230 = vmatmul.mubr.f32.gmra.mxu0 %v2094
        %v2231 = vpop.f32.mrf.mxu0
        %v2232 = vadd.f32 %v2056, %v2231
        %v2233 = vpop.f32.mrf.mxu0
        %2234 = vmatprep.mubr.f32.mxu0 0.0
        %2235 = vmatmul.mubr.f32.gmra.mxu0 %v2097
        %v2236 = vpop.f32.mrf.mxu0
        %v2237 = vadd.f32 %v2056, %v2236
        %v2238 = vpop.f32.mrf.mxu0
        %2239 = vmatprep.mubr.f32.mxu0 0.0
        %2240 = vmatmul.mubr.f32.gmra.mxu0 %v2100
        %v2241 = vpop.f32.mrf.mxu0
        %v2242 = vadd.f32 %v2056, %v2241
        %v2243 = vpop.f32.mrf.mxu0
        %2244 = vmatprep.mubr.f32.mxu0 0.0
        %2245 = vmatmul.mubr.f32.gmra.mxu0 %v2103
        %v2246 = vpop.f32.mrf.mxu0
        %v2247 = vadd.f32 %v2056, %v2246
        %v2248 = vpop.f32.mrf.mxu0
        %2249 = vdwg.mxu0
        %v2250 = vmax.f32 %v2172, 0.0
        %v2251 = vmax.f32 %v2177, 0.0
        %v2252 = vmax.f32 %v2182, 0.0
        %v2253 = vmax.f32 %v2187, 0.0
        %v2254 = vmax.f32 %v2192, 0.0
        %v2255 = vmax.f32 %v2197, 0.0
        %v2256 = vmax.f32 %v2202, 0.0
        %v2257 = vmax.f32 %v2207, 0.0
        %v2258 = vmax.f32 %v2212, 0.0
        %v2259 = vmax.f32 %v2217, 0.0
        %v2260 = vmax.f32 %v2222, 0.0
        %v2261 = vmax.f32 %v2227, 0.0
        %v2262 = vmax.f32 %v2232, 0.0
        %v2263 = vmax.f32 %v2237, 0.0
        %v2264 = vmax.f32 %v2242, 0.0
        %v2265 = vmax.f32 %v2247, 0.0
        %s2266 = scalar_lea.vmem %s3, 416
        %v2267 = vld [vmem:[%s2266] sm:$0xff]
        %v2268 = vld [vmem:[%s2266 + $0x8] sm:$0xff]
        %s2269 = scalar_lea.vmem %s3, 448
        %v2270 = vld [vmem:[%s2269] sm:$0x1]
        %v2271 = vlaneseq
        %v2272 = vshrl.u32 %v2271, 7
        %v2273 = vsub.s32 0, %v2272
        %v2274 = vrot.slane %v2270, %v2273
        %v2276 = vsel %vm729, %v2250, 0
        %v2279 = vsel %vm729, %v2251, 0
        %v2282 = vsel %vm729, %v2252, 0
        %v2285 = vsel %vm729, %v2253, 0
        %v2288 = vsel %vm729, %v2254, 0
        %v2291 = vsel %vm729, %v2255, 0
        %v2294 = vsel %vm729, %v2256, 0
        %v2297 = vsel %vm729, %v2257, 0
        %v2300 = vsel %vm729, %v2258, 0
        %v2303 = vsel %vm729, %v2259, 0
        %v2306 = vsel %vm729, %v2260, 0
        %v2309 = vsel %vm729, %v2261, 0
        %v2312 = vsel %vm729, %v2262, 0
        %v2315 = vsel %vm729, %v2263, 0
        %v2318 = vsel %vm729, %v2264, 0
        %v2321 = vsel %vm729, %v2265, 0
        %2323 = vmatprep.subr.mxu0 0.0
        %2324 = vmatpush1.msra.mxu0 0.0
        %2325 = vmatprep.subr.mxu0 0.0
        %2326 = vmatpush1.msra.mxu0 0.0
        %2327 = vmatprep.subr.mxu0 0.0
        %2328 = vmatpush1.msra.mxu0 0.0
        %2329 = vmatprep.subr.mxu0 0.0
        %2330 = vmatpush1.msra.mxu0 0.0
        %2331 = vmatprep.subr.mxu0 0.0
        %2332 = vmatpush1.msra.mxu0 0.0
        %2333 = vmatprep.subr.mxu0 0.0
        %2334 = vmatpush1.msra.mxu0 0.0
        %2335 = vmatprep.subr.mxu0 0.0
        %2336 = vmatpush1.msra.mxu0 0.0
        %2337 = vmatprep.subr.mxu0 0.0
        %2338 = vmatpush1.msra.mxu0 0.0
        %2339 = vmatprep.subr.mxu0 0.0
        %2340 = vmatpush1.msra.mxu0 0.0
        %2341 = vmatprep.subr.mxu0 0.0
        %2342 = vmatpush1.msra.mxu0 0.0
        %2343 = vmatprep.subr.mxu0 0.0
        %2344 = vmatpush1.msra.mxu0 0.0
        %2345 = vmatprep.subr.mxu0 0.0
        %2346 = vmatpush1.msra.mxu0 0.0
        %2347 = vmatprep.subr.mxu0 0.0
        %2348 = vmatpush1.msra.mxu0 0.0
        %2349 = vmatprep.subr.mxu0 0.0
        %2350 = vmatpush1.msra.mxu0 0.0
        %2351 = vmatprep.subr.mxu0 0.0
        %2352 = vmatpush1.msra.mxu0 %v2268
        %2353 = vmatprep.subr.mxu0 0.0
        %2354 = vmatpush1.msra.mxu0 %v2267
        %2355 = vmatprep.subr.mxu0 0.0
        %2356 = vmatpush2.msra.mxu0 0.0
        %2357 = vmatprep.subr.mxu0 0.0
        %2358 = vmatpush2.msra.mxu0 0.0
        %2359 = vmatprep.subr.mxu0 0.0
        %2360 = vmatpush2.msra.mxu0 0.0
        %2361 = vmatprep.subr.mxu0 0.0
        %2362 = vmatpush2.msra.mxu0 0.0
        %2363 = vmatprep.subr.mxu0 0.0
        %2364 = vmatpush2.msra.mxu0 0.0
        %2365 = vmatprep.subr.mxu0 0.0
        %2366 = vmatpush2.msra.mxu0 0.0
        %2367 = vmatprep.subr.mxu0 0.0
        %2368 = vmatpush2.msra.mxu0 0.0
        %2369 = vmatprep.subr.mxu0 0.0
        %2370 = vmatpush2.msra.mxu0 0.0
        %2371 = vmatprep.subr.mxu0 0.0
        %2372 = vmatpush2.msra.mxu0 0.0
        %2373 = vmatprep.subr.mxu0 0.0
        %2374 = vmatpush2.msra.mxu0 0.0
        %2375 = vmatprep.subr.mxu0 0.0
        %2376 = vmatpush2.msra.mxu0 0.0
        %2377 = vmatprep.subr.mxu0 0.0
        %2378 = vmatpush2.msra.mxu0 0.0
        %2379 = vmatprep.subr.mxu0 0.0
        %2380 = vmatpush2.msra.mxu0 0.0
        %2381 = vmatprep.subr.mxu0 0.0
        %2382 = vmatpush2.msra.mxu0 0.0
        %2383 = vmatprep.subr.mxu0 0.0
        %2384 = vmatpush2.msra.mxu0 0.0
        %2385 = vmatprep.subr.mxu0 0.0
        %2386 = vmatpush2.msra.mxu0 0.0
        %2387 = vmatprep.mubr.f32.mxu0 0.0
        %2388 = vmatmul.mubr.f32.gmra.mxu0 %v2276
        %v2389 = vpop.f32.mrf.mxu0
        %v2390 = vadd.f32 %v2274, %v2389
        %v2391 = vpop.f32.mrf.mxu0
        %2392 = vmatprep.mubr.f32.mxu0 0.0
        %2393 = vmatmul.mubr.f32.gmra.mxu0 %v2279
        %v2394 = vpop.f32.mrf.mxu0
        %v2395 = vadd.f32 %v2274, %v2394
        %v2396 = vpop.f32.mrf.mxu0
        %2397 = vmatprep.mubr.f32.mxu0 0.0
        %2398 = vmatmul.mubr.f32.gmra.mxu0 %v2282
        %v2399 = vpop.f32.mrf.mxu0
        %v2400 = vadd.f32 %v2274, %v2399
        %v2401 = vpop.f32.mrf.mxu0
        %2402 = vmatprep.mubr.f32.mxu0 0.0
        %2403 = vmatmul.mubr.f32.gmra.mxu0 %v2285
        %v2404 = vpop.f32.mrf.mxu0
        %v2405 = vadd.f32 %v2274, %v2404
        %v2406 = vpop.f32.mrf.mxu0
        %2407 = vmatprep.mubr.f32.mxu0 0.0
        %2408 = vmatmul.mubr.f32.gmra.mxu0 %v2288
        %v2409 = vpop.f32.mrf.mxu0
        %v2410 = vadd.f32 %v2274, %v2409
        %v2411 = vpop.f32.mrf.mxu0
        %2412 = vmatprep.mubr.f32.mxu0 0.0
        %2413 = vmatmul.mubr.f32.gmra.mxu0 %v2291
        %v2414 = vpop.f32.mrf.mxu0
        %v2415 = vadd.f32 %v2274, %v2414
        %v2416 = vpop.f32.mrf.mxu0
        %2417 = vmatprep.mubr.f32.mxu0 0.0
        %2418 = vmatmul.mubr.f32.gmra.mxu0 %v2294
        %v2419 = vpop.f32.mrf.mxu0
        %v2420 = vadd.f32 %v2274, %v2419
        %v2421 = vpop.f32.mrf.mxu0
        %2422 = vmatprep.mubr.f32.mxu0 0.0
        %2423 = vmatmul.mubr.f32.gmra.mxu0 %v2297
        %v2424 = vpop.f32.mrf.mxu0
        %v2425 = vadd.f32 %v2274, %v2424
        %v2426 = vpop.f32.mrf.mxu0
        %2427 = vmatprep.mubr.f32.mxu0 0.0
        %2428 = vmatmul.mubr.f32.gmra.mxu0 %v2300
        %v2429 = vpop.f32.mrf.mxu0
        %v2430 = vadd.f32 %v2274, %v2429
        %v2431 = vpop.f32.mrf.mxu0
        %2432 = vmatprep.mubr.f32.mxu0 0.0
        %2433 = vmatmul.mubr.f32.gmra.mxu0 %v2303
        %v2434 = vpop.f32.mrf.mxu0
        %v2435 = vadd.f32 %v2274, %v2434
        %v2436 = vpop.f32.mrf.mxu0
        %2437 = vmatprep.mubr.f32.mxu0 0.0
        %2438 = vmatmul.mubr.f32.gmra.mxu0 %v2306
        %v2439 = vpop.f32.mrf.mxu0
        %v2440 = vadd.f32 %v2274, %v2439
        %v2441 = vpop.f32.mrf.mxu0
        %2442 = vmatprep.mubr.f32.mxu0 0.0
        %2443 = vmatmul.mubr.f32.gmra.mxu0 %v2309
        %v2444 = vpop.f32.mrf.mxu0
        %v2445 = vadd.f32 %v2274, %v2444
        %v2446 = vpop.f32.mrf.mxu0
        %2447 = vmatprep.mubr.f32.mxu0 0.0
        %2448 = vmatmul.mubr.f32.gmra.mxu0 %v2312
        %v2449 = vpop.f32.mrf.mxu0
        %v2450 = vadd.f32 %v2274, %v2449
        %v2451 = vpop.f32.mrf.mxu0
        %2452 = vmatprep.mubr.f32.mxu0 0.0
        %2453 = vmatmul.mubr.f32.gmra.mxu0 %v2315
        %v2454 = vpop.f32.mrf.mxu0
        %v2455 = vadd.f32 %v2274, %v2454
        %v2456 = vpop.f32.mrf.mxu0
        %2457 = vmatprep.mubr.f32.mxu0 0.0
        %2458 = vmatmul.mubr.f32.gmra.mxu0 %v2318
        %v2459 = vpop.f32.mrf.mxu0
        %v2460 = vadd.f32 %v2274, %v2459
        %v2461 = vpop.f32.mrf.mxu0
        %2462 = vmatprep.mubr.f32.mxu0 0.0
        %2463 = vmatmul.mubr.f32.gmra.mxu0 %v2321
        %v2464 = vpop.f32.mrf.mxu0
        %v2465 = vadd.f32 %v2274, %v2464
        %v2466 = vpop.f32.mrf.mxu0
        %2467 = vdwg.mxu0
        %2468 = vst [vmem:[%s216] sm:$0xff] %v2390
        %2469 = vst [vmem:[%s216 + $0x8] sm:$0xff] %v2395
        %2470 = vst [vmem:[%s216 + $0x10] sm:$0xff] %v2400
        %2471 = vst [vmem:[%s216 + $0x18] sm:$0xff] %v2405
        %2472 = vst [vmem:[%s216 + $0x20] sm:$0xff] %v2410
        %2473 = vst [vmem:[%s216 + $0x28] sm:$0xff] %v2415
        %2474 = vst [vmem:[%s216 + $0x30] sm:$0xff] %v2420
        %2475 = vst [vmem:[%s216 + $0x38] sm:$0xff] %v2425
        %2476 = vst [vmem:[%s216 + $0x40] sm:$0xff] %v2430
        %2477 = vst [vmem:[%s216 + $0x48] sm:$0xff] %v2435
        %2478 = vst [vmem:[%s216 + $0x50] sm:$0xff] %v2440
        %2479 = vst [vmem:[%s216 + $0x58] sm:$0xff] %v2445
        %2480 = vst [vmem:[%s216 + $0x60] sm:$0xff] %v2450
        %2481 = vst [vmem:[%s216 + $0x68] sm:$0xff] %v2455
        %2482 = vst [vmem:[%s216 + $0x70] sm:$0xff] %v2460
        %2483 = vst [vmem:[%s216 + $0x78] sm:$0xff] %v2465
        %s2484 = sand.u32 %s125, 1
        %s2485 = scalar_lea.sflag [#allocation3], %s2484
        %s2486 = sand.u32 %s125, 1
        %s2487 = smul.addr %s2486, 128
        %s2488 = scalar_lea.vmem [#allocation2], %s2487
        // Predicated region
        $region37: #{feature_generation_net2_batched.1} parent=35 // pred_check
          %p2489 = pneg %p135
        $region38: #{feature_generation_net2_batched.1} parent=35 // pred_check_branch
          %2491 = sbr.rel (%p2489) target = $region40
        $region39: #{feature_generation_net2_batched.1} parent=35 // pred_region
          %s2493 = ssub.s32 2048, 2048
          %2494 = vsyncadd %s2485, %s2493
          %s2495 = smul.addr %s18, 16
          %s2496 = smul.addr %s2495, 128
          %s2497 = scalar_lea.hbm %s4, %s2496
          %s2498 = sshll.u32 %s2488, 4
          %s2499 = int_to_ptr.vmem [resolvable:$true] %s2498
          %2504 = dma.vmem_to_hbm [thread:$0]  %s2499, 2048, %s2497, %s2485, 128, 128, 8
        $region40: #{feature_generation_net2_batched.1} parent=35 // pred_fallthru
          _
      $region36: #{feature_generation_net2_batched.1} parent=5 // pred_fallthru
        _
      %p2505 = scmp.le.s32.totalorder 2, %s13
      // Predicated region
      $region41: #{feature_generation_net2_batched.1} parent=5 // pred_check
        %p2506 = pneg %p2505
      $region42: #{feature_generation_net2_batched.1} parent=5 // pred_check_branch
        %2508 = sbr.rel (%p2506) target = $region44
      $region43: #{feature_generation_net2_batched.1} parent=5 // pred_region
        %s2509 = ssub.s32 %s13, 2
        // Predicated region
        $region45: #{feature_generation_net2_batched.1} parent=43 // pred_check
          %p2510 = pneg %p141
        $region46: #{feature_generation_net2_batched.1} parent=43 // pred_check_branch
          %2512 = sbr.rel (%p2510) target = $region48
        $region47: #{feature_generation_net2_batched.1} parent=43 // pred_region
          %s2513 = sand.u32 %s126, 1
          %s2514 = scalar_lea.sflag [#allocation3], %s2513
          %s2515 = sand.u32 %s126, 1
          %s2516 = smul.addr %s2515, 128
          %s2517 = scalar_lea.vmem [#allocation2], %s2516
          %2518 = dma.done %s2514, 2048
        $region48: #{feature_generation_net2_batched.1} parent=43 // pred_fallthru
          _
      $region44: #{feature_generation_net2_batched.1} parent=5 // pred_fallthru
        _
    $region6: #{feature_generation_net2_batched.1} parent=1 // loop_footer
      %s17 = sadd.s32 1, %s13
    $region7: #{feature_generation_net2_batched.1} parent=1 // loop_footer_branch
      %12 = sbr.rel target = $region3
    $region8: #{feature_generation_net2_batched.1} parent=1 // loop_exit
      _
    %2519 = vsyncpa [#allocation3], 1
    %s2520 = scalar_lea.sflag [#allocation3], 1
    %2521 = vsyncpa %s2520, 1

</llo_original>
